<compile_context>
chip_gen: v7x
topology: tpu7x:2x2x1
jax: 0.10.0
libtpu: 0.0.40
codegen_flags: <defaults>
</compile_context>

<pallas_src>
import math

import jax
import jax.numpy as jnp
from jax.experimental import pallas as pl
from jax.experimental.pallas import tpu as pltpu


def _pick_rows_per_tile(H, W):
    """Rows per grid step: RT*W a multiple of 128, RT divides H, >=4 tiles if possible."""
    g = math.gcd(W, 128)
    rt = 128 // g                      # smallest RT with RT*W % 128 == 0
    if rt > H or H % rt != 0:
        return H                       # fall back: whole image per grid step
    while rt * 2 <= 32 and H % (rt * 2) == 0 and H // (rt * 2) >= 4:
        rt *= 2
    return rt


def _make_kernel(C, H, W, RT, num_row_tiles, eps):
    N = H * W
    RTW = RT * W
    PADW = (RT + 2) * W + 2            # 1 halo row above/below + 1 corner col each side
    CEN = 1 + W                        # scratch lane offset of the first center token
    WTOT = ((W + 127) // 128) * 128    # 128-aligned window that contains one image row

    def kernel(x_ref, w_ref, g_ref, b_ref, o_ref, xpad_ref):
        # x_ref : (C, N)   resident image of this batch element (input dtype)
        # w_ref : (C, 9)   depthwise weights, kh-major / kw-minor
        # g_ref : (C, 1)   LayerNorm gamma
        # b_ref : (C, 1)   LayerNorm beta
        # o_ref : (C, RTW) output tile
        # xpad  : (C, PADW) f32 haloed slab (VMEM scratch)
        r = pl.program_id(1)
        f32 = jnp.float32

        # ---- assemble the haloed tile in VMEM scratch (single cast to f32) ----
        if num_row_tiles == 1:
            center = x_ref[...]
        else:
            base = pl.multiple_of(r * RTW, 128)
            center = x_ref[:, pl.ds(base, RTW)]
        xpad_ref[:, CEN:CEN + RTW] = center.astype(f32)

        zero_row = jnp.zeros((C, W), f32)
        zero_col = jnp.zeros((C, 1), f32)
        # Corner columns are only read by horizontally-masked taps; keep them zero.
        xpad_ref[:, 0:1] = zero_col
        xpad_ref[:, PADW - 1:PADW] = zero_col

        if num_row_tiles == 1:
            xpad_ref[:, 1:1 + W] = zero_row
            xpad_ref[:, CEN + RTW:CEN + RTW + W] = zero_row
        else:
            # Row above the tile (zero padding at the top image border).
            @pl.when(r == 0)
            def _():
                xpad_ref[:, 1:1 + W] = zero_row

            @pl.when(r > 0)
            def _():
                start = pl.multiple_of(r * RTW - WTOT, 128)
                win = x_ref[:, pl.ds(start, WTOT)]       # aligned window ending at the tile
                xpad_ref[:, 1:1 + W] = win[:, WTOT - W:].astype(f32)

            # Row below the tile (zero padding at the bottom image border).
            @pl.when(r == num_row_tiles - 1)
            def _():
                xpad_ref[:, CEN + RTW:CEN + RTW + W] = zero_row

            @pl.when(r < num_row_tiles - 1)
            def _():
                start = pl.multiple_of((r + 1) * RTW, 128)
                win = x_ref[:, pl.ds(start, WTOT)]       # aligned window after the tile
                xpad_ref[:, CEN + RTW:CEN + RTW + W] = win[:, :W].astype(f32)

        # ---- depthwise 3x3 conv: 9 shifted fused multiply-adds ----
        wf = w_ref[...].astype(f32)                      # (C, 9), loaded once
        lane = jax.lax.broadcasted_iota(jnp.int32, (1, RTW), 1)
        if W & (W - 1) == 0:
            col = jnp.bitwise_and(lane, W - 1)
        else:
            col = jax.lax.rem(lane, W)
        not_first_col = col != 0
        not_last_col = col != (W - 1)

        acc = jnp.zeros((C, RTW), f32)
        for kh in range(3):
            for kw in range(3):
                off = kh * W + kw
                tap = xpad_ref[:, off:off + RTW]         # (C, RTW), already f32
                if kw == 0:
                    tap = jnp.where(not_first_col, tap, 0.0)
                elif kw == 2:
                    tap = jnp.where(not_last_col, tap, 0.0)
                acc = acc + tap * wf[:, kh * 3 + kw:kh * 3 + kw + 1]

        # ---- LayerNorm over the channel (sublane) axis ----
        mean = jnp.mean(acc, axis=0, keepdims=True)
        centered = acc - mean
        var = jnp.mean(centered * centered, axis=0, keepdims=True)
        normed = centered * jax.lax.rsqrt(var + eps)
        normed = normed * g_ref[...].astype(f32) + b_ref[...].astype(f32)

        # ---- residual add (center rows are already in scratch, f32) ----
        out = xpad_ref[:, CEN:CEN + RTW] + normed
        o_ref[...] = out.astype(o_ref.dtype)

    return kernel


def _vmem_limit_bytes(C, N, RT, W, itemsize):
    x_block = 2 * C * N * itemsize                 # double-buffered resident input
    o_block = 2 * C * RT * W * itemsize            # double-buffered output tile
    scratch = C * ((RT + 2) * W + 2) * 4
    params = 2 * C * (9 + 1 + 1) * 4
    compute = 3 * C * RT * W * 4                   # acc / tap temporaries
    est = x_block + o_block + scratch + params + compute
    return int(min(max(2 * est, 16 * 1024 * 1024), 64 * 1024 * 1024))


def _rep_cpe_tensor(x, conv_w, ln_gamma, ln_beta, *, eps=1e-6):
    B, C, H, W = x.shape
    N = H * W
    RT = _pick_rows_per_tile(H, W)
    num_row_tiles = H // RT
    RTW = RT * W

    x_flat = x.reshape(B, C, N)            # contiguous reshape: no data movement
    w9 = conv_w.reshape(C, 9)              # (C,1,3,3) -> (C,9), kh-major / kw-minor
    gamma2 = ln_gamma.reshape(C, 1)
    beta2 = ln_beta.reshape(C, 1)

    kernel = _make_kernel(C, H, W, RT, num_row_tiles, float(eps))

    out = pl.pallas_call(
        kernel,
        out_shape=jax.ShapeDtypeStruct((B, C, N), x.dtype),
        grid_spec=pltpu.PrefetchScalarGridSpec(
            num_scalar_prefetch=0,
            grid=(B, num_row_tiles),
            in_specs=[
                # Full image resident across the row-tile axis -> fetched once per b.
                pl.BlockSpec((None, C, N), lambda b, r: (b, 0, 0)),
                pl.BlockSpec((C, 9), lambda b, r: (0, 0)),
                pl.BlockSpec((C, 1), lambda b, r: (0, 0)),
                pl.BlockSpec((C, 1), lambda b, r: (0, 0)),
            ],
            out_specs=pl.BlockSpec((None, C, RTW), lambda b, r: (b, 0, r)),
            scratch_shapes=[pltpu.VMEM((C, (RT + 2) * W + 2), jnp.float32)],
        ),
        compiler_params=pltpu.CompilerParams(
            dimension_semantics=("parallel", "parallel"),
            vmem_limit_bytes=_vmem_limit_bytes(C, N, RT, W, jnp.dtype(x.dtype).itemsize),
        ),
    )(x_flat, w9, gamma2, beta2)

    return out.reshape(B, C, H, W)


def rep_cpe(x, conv_w, ln_gamma, ln_beta, *, eps=1e-6):
    """RepCPE.forward: out = x + LN_C(dwconv3x3(x)); supports the (tensor, aux) tuple form."""
    if isinstance(x, tuple):
        return (_rep_cpe_tensor(x[0], conv_w, ln_gamma, ln_beta, eps=eps), x[1])
    return _rep_cpe_tensor(x, conv_w, ln_gamma, ln_beta, eps=eps)


def _reference(x, conv_w, gamma, beta, eps=1e-6):
    """Pure-JAX reference: depthwise 3x3 conv (no bias) + channel LayerNorm + residual."""
    B, C, H, W = x.shape
    w = conv_w.reshape(C, 3, 3)
    xp = jnp.pad(x, ((0, 0), (0, 0), (1, 1), (1, 1)))
    y = jnp.zeros_like(x)
    for kh in range(3):
        for kw in range(3):
            y = y + xp[:, :, kh:kh + H, kw:kw + W] * w[:, kh, kw][None, :, None, None]
    mean = jnp.mean(y, axis=1, keepdims=True)
    var = jnp.mean((y - mean) ** 2, axis=1, keepdims=True)
    yn = (y - mean) * jax.lax.rsqrt(var + eps)
    yn = yn * gamma[None, :, None, None] + beta[None, :, None, None]
    return x + yn


if __name__ == "__main__":
    B, C, H, W = 2, 64, 32, 32   # small NCHW input consistent with RepCPE

    key = jax.random.PRNGKey(0)
    kx, kw, kg, kb = jax.random.split(key, 4)
    x = jax.random.normal(kx, (B, C, H, W), dtype=jnp.float32)
    conv_w = jax.random.normal(kw, (C, 1, 3, 3), dtype=jnp.float32) * 0.2
    ln_gamma = 1.0 + 0.1 * jax.random.normal(kg, (C,), dtype=jnp.float32)
    ln_beta = 0.1 * jax.random.normal(kb, (C,), dtype=jnp.float32)

    out = rep_cpe(x, conv_w, ln_gamma, ln_beta)
    out = jax.block_until_ready(out)

    ref = _reference(x, conv_w, ln_gamma, ln_beta)
    assert out.shape == x.shape
    err = float(jnp.max(jnp.abs(out - ref)))
    assert err < 1e-4, f"max abs err {err}"
    print("KERNEL_OK")
</pallas_src>

<mosaic_0001>
module attributes {stable_mosaic.version = 11 : i64} {
  func.func @kernel(%arg0: i32, %arg1: i32, %arg2: memref<1x64x1024xf32, #tpu.memory_space<vmem>>, %arg3: memref<64x9xf32, #tpu.memory_space<vmem>>, %arg4: memref<64x1xf32, #tpu.memory_space<vmem>>, %arg5: memref<64x1xf32, #tpu.memory_space<vmem>>, %arg6: memref<1x64x256xf32, #tpu.memory_space<vmem>>, %arg7: memref<64x322xf32, #tpu.memory_space<vmem>>) attributes {dimension_semantics = [#tpu.dimension_semantics<parallel>, #tpu.dimension_semantics<parallel>], iteration_bounds = array<i64: 2, 4>, scalar_prefetch = 0 : i64, scratch_operands = 1 : i64, tpu.core_type = #tpu.core_type<tc>, window_params = [{transform_indices = @transform_0, window_bounds = array<i64: 1, 64, 1024>}, {pipeline_mode = #tpu.pipeline_mode<synchronous>, transform_indices = @transform_1, window_bounds = array<i64: 64, 9>}, {pipeline_mode = #tpu.pipeline_mode<synchronous>, transform_indices = @transform_2, window_bounds = array<i64: 64, 1>}, {pipeline_mode = #tpu.pipeline_mode<synchronous>, transform_indices = @transform_3, window_bounds = array<i64: 64, 1>}, {transform_indices = @transform_4, window_bounds = array<i64: 1, 64, 256>}]} {
    %c256_i32 = arith.constant 256 : i32
    %0 = arith.muli %arg1, %c256_i32 : i32
    %1 = tpu.assume_multiple %0, 128 : i32
    %c0 = arith.constant 0 : index
    %c0_0 = arith.constant 0 : index
    %2 = arith.index_cast %1 : i32 to index
    %3 = vector.load %arg2[%c0, %c0_0, %2] : memref<1x64x1024xf32, #tpu.memory_space<vmem>>, vector<1x64x256xf32>
    %4 = vector.shape_cast %3 : vector<1x64x256xf32> to vector<64x256xf32>
    %c0_1 = arith.constant 0 : index
    %c33 = arith.constant 33 : index
    %5 = vector.load %arg7[%c0_1, %c33] : memref<64x322xf32, #tpu.memory_space<vmem>>, vector<64x256xf32>
    tpu.vector_store %arg7[%c0_1, %c33], %4 {strides = array<i32>} : memref<64x322xf32, #tpu.memory_space<vmem>>, vector<64x256xf32>,
    %cst = arith.constant 0.000000e+00 : f32
    %6 = vector.broadcast %cst : f32 to vector<64x32xf32>
    %cst_2 = arith.constant 0.000000e+00 : f32
    %7 = vector.broadcast %cst_2 : f32 to vector<64x1xf32>
    %c0_3 = arith.constant 0 : index
    %c0_4 = arith.constant 0 : index
    %8 = vector.load %arg7[%c0_3, %c0_4] : memref<64x322xf32, #tpu.memory_space<vmem>>, vector<64x1xf32>
    tpu.vector_store %arg7[%c0_3, %c0_4], %7 {strides = array<i32>} : memref<64x322xf32, #tpu.memory_space<vmem>>, vector<64x1xf32>,
    %c0_5 = arith.constant 0 : index
    %c321 = arith.constant 321 : index
    %9 = vector.load %arg7[%c0_5, %c321] : memref<64x322xf32, #tpu.memory_space<vmem>>, vector<64x1xf32>
    tpu.vector_store %arg7[%c0_5, %c321], %7 {strides = array<i32>} : memref<64x322xf32, #tpu.memory_space<vmem>>, vector<64x1xf32>,
    %c0_i32 = arith.constant 0 : i32
    %10 = arith.cmpi eq, %arg1, %c0_i32 : i32
    %11 = arith.extui %10 : i1 to i32
    %c0_i32_6 = arith.constant 0 : i32
    %12 = arith.cmpi ne, %11, %c0_i32_6 : i32
    scf.if %12 {
      %c0_48 = arith.constant 0 : index
      %c1_49 = arith.constant 1 : index
      %127 = vector.load %arg7[%c0_48, %c1_49] : memref<64x322xf32, #tpu.memory_space<vmem>>, vector<64x32xf32>
      tpu.vector_store %arg7[%c0_48, %c1_49], %6 {strides = array<i32>} : memref<64x322xf32, #tpu.memory_space<vmem>>, vector<64x32xf32>,
    } else {
    }
    %c0_i32_7 = arith.constant 0 : i32
    %13 = arith.cmpi sgt, %arg1, %c0_i32_7 : i32
    %14 = arith.extui %13 : i1 to i32
    %c0_i32_8 = arith.constant 0 : i32
    %15 = arith.cmpi ne, %14, %c0_i32_8 : i32
    scf.if %15 {
      %c256_i32_48 = arith.constant 256 : i32
      %127 = arith.muli %arg1, %c256_i32_48 : i32
      %c128_i32 = arith.constant 128 : i32
      %128 = arith.subi %127, %c128_i32 : i32
      %129 = tpu.assume_multiple %128, 128 : i32
      %c0_49 = arith.constant 0 : index
      %c0_50 = arith.constant 0 : index
      %130 = arith.index_cast %129 : i32 to index
      %131 = vector.load %arg2[%c0_49, %c0_50, %130] : memref<1x64x1024xf32, #tpu.memory_space<vmem>>, vector<1x64x128xf32>
      %132 = vector.shape_cast %131 : vector<1x64x128xf32> to vector<64x128xf32>
      %133 = vector.extract_strided_slice %132 {offsets = [0, 96], sizes = [64, 32], strides = [1, 1]} : vector<64x128xf32> to vector<64x32xf32>
      %c0_51 = arith.constant 0 : index
      %c1_52 = arith.constant 1 : index
      %134 = vector.load %arg7[%c0_51, %c1_52] : memref<64x322xf32, #tpu.memory_space<vmem>>, vector<64x32xf32>
      tpu.vector_store %arg7[%c0_51, %c1_52], %133 {strides = array<i32>} : memref<64x322xf32, #tpu.memory_space<vmem>>, vector<64x32xf32>,
    } else {
    }
    %c3_i32 = arith.constant 3 : i32
    %16 = arith.cmpi eq, %arg1, %c3_i32 : i32
    %17 = arith.extui %16 : i1 to i32
    %c0_i32_9 = arith.constant 0 : i32
    %18 = arith.cmpi ne, %17, %c0_i32_9 : i32
    scf.if %18 {
      %c0_48 = arith.constant 0 : index
      %c289 = arith.constant 289 : index
      %127 = vector.load %arg7[%c0_48, %c289] : memref<64x322xf32, #tpu.memory_space<vmem>>, vector<64x32xf32>
      tpu.vector_store %arg7[%c0_48, %c289], %6 {strides = array<i32>} : memref<64x322xf32, #tpu.memory_space<vmem>>, vector<64x32xf32>,
    } else {
    }
    %c3_i32_10 = arith.constant 3 : i32
    %19 = arith.cmpi slt, %arg1, %c3_i32_10 : i32
    %20 = arith.extui %19 : i1 to i32
    %c0_i32_11 = arith.constant 0 : i32
    %21 = arith.cmpi ne, %20, %c0_i32_11 : i32
    scf.if %21 {
      %c1_i32 = arith.constant 1 : i32
      %127 = arith.addi %arg1, %c1_i32 : i32
      %c256_i32_48 = arith.constant 256 : i32
      %128 = arith.muli %127, %c256_i32_48 : i32
      %129 = tpu.assume_multiple %128, 128 : i32
      %c0_49 = arith.constant 0 : index
      %c0_50 = arith.constant 0 : index
      %130 = arith.index_cast %129 : i32 to index
      %131 = vector.load %arg2[%c0_49, %c0_50, %130] : memref<1x64x1024xf32, #tpu.memory_space<vmem>>, vector<1x64x128xf32>
      %132 = vector.shape_cast %131 : vector<1x64x128xf32> to vector<64x128xf32>
      %133 = vector.extract_strided_slice %132 {offsets = [0, 0], sizes = [64, 32], strides = [1, 1]} : vector<64x128xf32> to vector<64x32xf32>
      %c0_51 = arith.constant 0 : index
      %c289 = arith.constant 289 : index
      %134 = vector.load %arg7[%c0_51, %c289] : memref<64x322xf32, #tpu.memory_space<vmem>>, vector<64x32xf32>
      tpu.vector_store %arg7[%c0_51, %c289], %133 {strides = array<i32>} : memref<64x322xf32, #tpu.memory_space<vmem>>, vector<64x32xf32>,
    } else {
    }
    %c0_12 = arith.constant 0 : index
    %c0_13 = arith.constant 0 : index
    %22 = vector.load %arg3[%c0_12, %c0_13] : memref<64x9xf32, #tpu.memory_space<vmem>>, vector<64x9xf32>
    %23 = tpu.iota {dimensions = array<i32: 1>} : vector<1x256xi32>
    %c31_i32 = arith.constant 31 : i32
    %24 = vector.broadcast %c31_i32 : i32 to vector<1x256xi32>
    %25 = arith.andi %23, %24 : vector<1x256xi32>
    %c0_i32_14 = arith.constant 0 : i32
    %26 = vector.broadcast %c0_i32_14 : i32 to vector<1x256xi32>
    %27 = arith.cmpi ne, %25, %26 : vector<1x256xi32>
    %c31_i32_15 = arith.constant 31 : i32
    %28 = vector.broadcast %c31_i32_15 : i32 to vector<1x256xi32>
    %29 = arith.cmpi ne, %25, %28 : vector<1x256xi32>
    %cst_16 = arith.constant 0.000000e+00 : f32
    %30 = vector.broadcast %cst_16 : f32 to vector<64x256xf32>
    %c0_17 = arith.constant 0 : index
    %c0_18 = arith.constant 0 : index
    %31 = vector.load %arg7[%c0_17, %c0_18] : memref<64x322xf32, #tpu.memory_space<vmem>>, vector<64x256xf32>
    %cst_19 = arith.constant 0.000000e+00 : f32
    %32 = vector.shape_cast %27 : vector<1x256xi1> to vector<1x256xi1>
    %33 = vector.broadcast %32 : vector<1x256xi1> to vector<64x256xi1>
    %34 = vector.broadcast %cst_19 : f32 to vector<64x256xf32>
    %35 = arith.select %33, %31, %34 : vector<64x256xi1>, vector<64x256xf32>
    %36 = vector.extract_strided_slice %22 {offsets = [0, 0], sizes = [64, 1], strides = [1, 1]} : vector<64x9xf32> to vector<64x1xf32>
    %37 = vector.broadcast %36 : vector<64x1xf32> to vector<64x256xf32>
    %38 = arith.mulf %35, %37 : vector<64x256xf32>
    %39 = arith.addf %30, %38 : vector<64x256xf32>
    %c0_20 = arith.constant 0 : index
    %c1 = arith.constant 1 : index
    %40 = vector.load %arg7[%c0_20, %c1] : memref<64x322xf32, #tpu.memory_space<vmem>>, vector<64x256xf32>
    %41 = vector.extract_strided_slice %22 {offsets = [0, 1], sizes = [64, 1], strides = [1, 1]} : vector<64x9xf32> to vector<64x1xf32>
    %42 = vector.broadcast %41 : vector<64x1xf32> to vector<64x256xf32>
    %43 = arith.mulf %40, %42 : vector<64x256xf32>
    %44 = arith.addf %39, %43 : vector<64x256xf32>
    %c0_21 = arith.constant 0 : index
    %c2 = arith.constant 2 : index
    %45 = vector.load %arg7[%c0_21, %c2] : memref<64x322xf32, #tpu.memory_space<vmem>>, vector<64x256xf32>
    %cst_22 = arith.constant 0.000000e+00 : f32
    %46 = vector.shape_cast %29 : vector<1x256xi1> to vector<1x256xi1>
    %47 = vector.broadcast %46 : vector<1x256xi1> to vector<64x256xi1>
    %48 = vector.broadcast %cst_22 : f32 to vector<64x256xf32>
    %49 = arith.select %47, %45, %48 : vector<64x256xi1>, vector<64x256xf32>
    %50 = vector.extract_strided_slice %22 {offsets = [0, 2], sizes = [64, 1], strides = [1, 1]} : vector<64x9xf32> to vector<64x1xf32>
    %51 = vector.broadcast %50 : vector<64x1xf32> to vector<64x256xf32>
    %52 = arith.mulf %49, %51 : vector<64x256xf32>
    %53 = arith.addf %44, %52 : vector<64x256xf32>
    %c0_23 = arith.constant 0 : index
    %c32 = arith.constant 32 : index
    %54 = vector.load %arg7[%c0_23, %c32] : memref<64x322xf32, #tpu.memory_space<vmem>>, vector<64x256xf32>
    %cst_24 = arith.constant 0.000000e+00 : f32
    %55 = vector.shape_cast %27 : vector<1x256xi1> to vector<1x256xi1>
    %56 = vector.broadcast %55 : vector<1x256xi1> to vector<64x256xi1>
    %57 = vector.broadcast %cst_24 : f32 to vector<64x256xf32>
    %58 = arith.select %56, %54, %57 : vector<64x256xi1>, vector<64x256xf32>
    %59 = vector.extract_strided_slice %22 {offsets = [0, 3], sizes = [64, 1], strides = [1, 1]} : vector<64x9xf32> to vector<64x1xf32>
    %60 = vector.broadcast %59 : vector<64x1xf32> to vector<64x256xf32>
    %61 = arith.mulf %58, %60 : vector<64x256xf32>
    %62 = arith.addf %53, %61 : vector<64x256xf32>
    %c0_25 = arith.constant 0 : index
    %c33_26 = arith.constant 33 : index
    %63 = vector.load %arg7[%c0_25, %c33_26] : memref<64x322xf32, #tpu.memory_space<vmem>>, vector<64x256xf32>
    %64 = vector.extract_strided_slice %22 {offsets = [0, 4], sizes = [64, 1], strides = [1, 1]} : vector<64x9xf32> to vector<64x1xf32>
    %65 = vector.broadcast %64 : vector<64x1xf32> to vector<64x256xf32>
    %66 = arith.mulf %63, %65 : vector<64x256xf32>
    %67 = arith.addf %62, %66 : vector<64x256xf32>
    %c0_27 = arith.constant 0 : index
    %c34 = arith.constant 34 : index
    %68 = vector.load %arg7[%c0_27, %c34] : memref<64x322xf32, #tpu.memory_space<vmem>>, vector<64x256xf32>
    %cst_28 = arith.constant 0.000000e+00 : f32
    %69 = vector.shape_cast %29 : vector<1x256xi1> to vector<1x256xi1>
    %70 = vector.broadcast %69 : vector<1x256xi1> to vector<64x256xi1>
    %71 = vector.broadcast %cst_28 : f32 to vector<64x256xf32>
    %72 = arith.select %70, %68, %71 : vector<64x256xi1>, vector<64x256xf32>
    %73 = vector.extract_strided_slice %22 {offsets = [0, 5], sizes = [64, 1], strides = [1, 1]} : vector<64x9xf32> to vector<64x1xf32>
    %74 = vector.broadcast %73 : vector<64x1xf32> to vector<64x256xf32>
    %75 = arith.mulf %72, %74 : vector<64x256xf32>
    %76 = arith.addf %67, %75 : vector<64x256xf32>
    %c0_29 = arith.constant 0 : index
    %c64 = arith.constant 64 : index
    %77 = vector.load %arg7[%c0_29, %c64] : memref<64x322xf32, #tpu.memory_space<vmem>>, vector<64x256xf32>
    %cst_30 = arith.constant 0.000000e+00 : f32
    %78 = vector.shape_cast %27 : vector<1x256xi1> to vector<1x256xi1>
    %79 = vector.broadcast %78 : vector<1x256xi1> to vector<64x256xi1>
    %80 = vector.broadcast %cst_30 : f32 to vector<64x256xf32>
    %81 = arith.select %79, %77, %80 : vector<64x256xi1>, vector<64x256xf32>
    %82 = vector.extract_strided_slice %22 {offsets = [0, 6], sizes = [64, 1], strides = [1, 1]} : vector<64x9xf32> to vector<64x1xf32>
    %83 = vector.broadcast %82 : vector<64x1xf32> to vector<64x256xf32>
    %84 = arith.mulf %81, %83 : vector<64x256xf32>
    %85 = arith.addf %76, %84 : vector<64x256xf32>
    %c0_31 = arith.constant 0 : index
    %c65 = arith.constant 65 : index
    %86 = vector.load %arg7[%c0_31, %c65] : memref<64x322xf32, #tpu.memory_space<vmem>>, vector<64x256xf32>
    %87 = vector.extract_strided_slice %22 {offsets = [0, 7], sizes = [64, 1], strides = [1, 1]} : vector<64x9xf32> to vector<64x1xf32>
    %88 = vector.broadcast %87 : vector<64x1xf32> to vector<64x256xf32>
    %89 = arith.mulf %86, %88 : vector<64x256xf32>
    %90 = arith.addf %85, %89 : vector<64x256xf32>
    %c0_32 = arith.constant 0 : index
    %c66 = arith.constant 66 : index
    %91 = vector.load %arg7[%c0_32, %c66] : memref<64x322xf32, #tpu.memory_space<vmem>>, vector<64x256xf32>
    %cst_33 = arith.constant 0.000000e+00 : f32
    %92 = vector.shape_cast %29 : vector<1x256xi1> to vector<1x256xi1>
    %93 = vector.broadcast %92 : vector<1x256xi1> to vector<64x256xi1>
    %94 = vector.broadcast %cst_33 : f32 to vector<64x256xf32>
    %95 = arith.select %93, %91, %94 : vector<64x256xi1>, vector<64x256xf32>
    %96 = vector.extract_strided_slice %22 {offsets = [0, 8], sizes = [64, 1], strides = [1, 1]} : vector<64x9xf32> to vector<64x1xf32>
    %97 = vector.broadcast %96 : vector<64x1xf32> to vector<64x256xf32>
    %98 = arith.mulf %95, %97 : vector<64x256xf32>
    %99 = arith.addf %90, %98 : vector<64x256xf32>
    %cst_34 = arith.constant dense<0.000000e+00> : vector<256xf32>
    %100 = vector.multi_reduction <add>, %99, %cst_34 [0] : vector<64x256xf32> to vector<256xf32>
    %101 = vector.shape_cast %100 : vector<256xf32> to vector<1x256xf32>
    %cst_35 = arith.constant 6.400000e+01 : f32
    %102 = vector.broadcast %cst_35 : f32 to vector<1x256xf32>
    %103 = arith.divf %101, %102 : vector<1x256xf32>
    %104 = vector.broadcast %103 : vector<1x256xf32> to vector<64x256xf32>
    %105 = arith.subf %99, %104 : vector<64x256xf32>
    %106 = arith.mulf %105, %105 : vector<64x256xf32>
    %cst_36 = arith.constant dense<0.000000e+00> : vector<256xf32>
    %107 = vector.multi_reduction <add>, %106, %cst_36 [0] : vector<64x256xf32> to vector<256xf32>
    %108 = vector.shape_cast %107 : vector<256xf32> to vector<1x256xf32>
    %cst_37 = arith.constant 6.400000e+01 : f32
    %109 = vector.broadcast %cst_37 : f32 to vector<1x256xf32>
    %110 = arith.divf %108, %109 : vector<1x256xf32>
    %cst_38 = arith.constant 9.99999997E-7 : f32
    %111 = vector.broadcast %cst_38 : f32 to vector<1x256xf32>
    %112 = arith.addf %110, %111 : vector<1x256xf32>
    %113 = math.rsqrt %112 : vector<1x256xf32>
    %114 = vector.broadcast %113 : vector<1x256xf32> to vector<64x256xf32>
    %115 = arith.mulf %105, %114 : vector<64x256xf32>
    %c0_39 = arith.constant 0 : index
    %c0_40 = arith.constant 0 : index
    %116 = vector.load %arg4[%c0_39, %c0_40] : memref<64x1xf32, #tpu.memory_space<vmem>>, vector<64x1xf32>
    %117 = vector.broadcast %116 : vector<64x1xf32> to vector<64x256xf32>
    %118 = arith.mulf %115, %117 : vector<64x256xf32>
    %c0_41 = arith.constant 0 : index
    %c0_42 = arith.constant 0 : index
    %119 = vector.load %arg5[%c0_41, %c0_42] : memref<64x1xf32, #tpu.memory_space<vmem>>, vector<64x1xf32>
    %120 = vector.broadcast %119 : vector<64x1xf32> to vector<64x256xf32>
    %121 = arith.addf %118, %120 : vector<64x256xf32>
    %c0_43 = arith.constant 0 : index
    %c33_44 = arith.constant 33 : index
    %122 = vector.load %arg7[%c0_43, %c33_44] : memref<64x322xf32, #tpu.memory_space<vmem>>, vector<64x256xf32>
    %123 = arith.addf %122, %121 : vector<64x256xf32>
    %c0_45 = arith.constant 0 : index
    %c0_46 = arith.constant 0 : index
    %c0_47 = arith.constant 0 : index
    %124 = vector.load %arg6[%c0_45, %c0_46, %c0_47] : memref<1x64x256xf32, #tpu.memory_space<vmem>>, vector<1x64x256xf32>
    %125 = vector.shape_cast %124 : vector<1x64x256xf32> to vector<64x256xf32>
    %126 = vector.shape_cast %123 : vector<64x256xf32> to vector<1x64x256xf32>
    tpu.vector_store %arg6[%c0_45, %c0_46, %c0_47], %126 {strides = array<i32>} : memref<1x64x256xf32, #tpu.memory_space<vmem>>, vector<1x64x256xf32>,
    return
  }
  func.func @transform_0(%arg0: i32, %arg1: i32) -> (i32, i32, i32) {
    %c0_i32 = arith.constant 0 : i32
    %c0_i32_0 = arith.constant 0 : i32
    %c0_i32_1 = arith.constant 0 : i32
    return %arg0, %c0_i32, %c0_i32_0 : i32, i32, i32
  }
  func.func @transform_1(%arg0: i32, %arg1: i32) -> (i32, i32) {
    %c0_i32 = arith.constant 0 : i32
    %c0_i32_0 = arith.constant 0 : i32
    %c0_i32_1 = arith.constant 0 : i32
    return %c0_i32, %c0_i32_0 : i32, i32
  }
  func.func @transform_2(%arg0: i32, %arg1: i32) -> (i32, i32) {
    %c0_i32 = arith.constant 0 : i32
    %c0_i32_0 = arith.constant 0 : i32
    %c0_i32_1 = arith.constant 0 : i32
    return %c0_i32, %c0_i32_0 : i32, i32
  }
  func.func @transform_3(%arg0: i32, %arg1: i32) -> (i32, i32) {
    %c0_i32 = arith.constant 0 : i32
    %c0_i32_0 = arith.constant 0 : i32
    %c0_i32_1 = arith.constant 0 : i32
    return %c0_i32, %c0_i32_0 : i32, i32
  }
  func.func @transform_4(%arg0: i32, %arg1: i32) -> (i32, i32, i32) {
    %c0_i32 = arith.constant 0 : i32
    %c0_i32_0 = arith.constant 0 : i32
    return %arg0, %c0_i32, %arg1 : i32, i32, i32
  }
}

</mosaic_0001>

<llo_original>
// kernel: tpu_custom_call.1
$region0: #{tpu_custom_call.1}
  #allocation0 [shape = 'u32[]', space=smem, size = 0x4, offset = 0x4, fixed_abs, tag = 'smem constant byte address 0x4 - core index']
  #allocation1 [shape = 'u32[144,128]{1,0:T(1,128)}', space=vmem, size = 0x12000, scoped, tag = 'internal scratch']
  #allocation2 [shape = 'f32[64,322]{1,0:T(8,128)}', space=vmem, size = 0x18000, scoped, tag = 'scratch operand']
  %s0 = inlined_call_operand.hbm [shape: f32[2,64,1024], index: 0, kind: input, shape index: {}]
  %s1 = inlined_call_operand.vmem [shape: f32[64,9], index: 1, kind: input, shape index: {}]
  %s2 = inlined_call_operand.vmem [shape: f32[64,1], index: 2, kind: input, shape index: {}]
  %s3 = inlined_call_operand.vmem [shape: f32[64,1], index: 3, kind: input, shape index: {}]
  %s4 = inlined_call_operand.hbm [shape: f32[2,64,1024], index: 4, kind: output, shape index: {}]
  %s5 = sld [smem:[#allocation0]]
  $region69: #{tpu_custom_call.1} parent=0
    _
  %s7 = ssub.s32 1, %s5
  %s8 = scalar_select 0, %s7, %s5
  $region1: #{tpu_custom_call.1} parent=0
    #allocation3 [shape = 'u8[524288]{0}', space=vmem, size = 0x80000, scoped, tag = 'input window, operand 0']
    #allocation4 [shape = 's32[2]{0}', space=sflag, size = 0x8, scoped, tag = 'scoped memory for tpu_custom_call.1']
    #allocation5 [shape = 's32[2]{0}', space=sflag, size = 0x8, scoped, tag = 'scoped memory for tpu_custom_call.1']
    #allocation6 [shape = 'u8[131072]{0}', space=vmem, size = 0x20000, scoped, tag = 'output window, operand 0']
    %9 = vsyncpa [#allocation4], 0
    %s10 = scalar_lea.sflag [#allocation4], 1
    %11 = vsyncpa %s10, 0
    %12 = vsyncpa [#allocation5], 0
    %s13 = scalar_lea.sflag [#allocation5], 1
    %14 = vsyncpa %s13, 0
    loop: start=0, step=1, limit=10
    $region2: #{tpu_custom_call.1} parent=1 // loop_pre_header
      _
    $region3: #{tpu_custom_call.1} parent=1 // loop_header
      %s16 = sphi 0, %s20
      %p17 = scmp.ge.s32.totalorder %s16, 10
      %s23 = sphi 0, %s35
      %s24 = sphi 0, %s31
      %s25 = sphi 0, %s23
      %s26 = sphi 0, %s24
      %s27 = sphi 0, %s25
      %s28 = sphi 0, %s26
      %s38 = sphi 0, %s40
      %s41 = sphi 0, %s38
      %s42 = sphi 0, %s41
      %s58 = sphi 0, %s42
      %s62 = sphi 0, %s62
      %s64 = sphi 0, %s62
      %s65 = sphi 0, %s64
      %s79 = sphi 0, %s65
      %s83 = sphi 0, %s83
      %s85 = sphi 0, %s83
      %s86 = sphi 0, %s85
      %s100 = sphi 0, %s86
      %s104 = sphi 0, %s104
      %s106 = sphi 0, %s104
      %s107 = sphi 0, %s106
      %s121 = sphi 0, %s107
      %s129 = sphi 0, %s131
      %s132 = sphi 0, %s129
      %s133 = sphi 0, %s132
      %s149 = sphi 0, %s133
    $region4: #{tpu_custom_call.1} parent=1 // loop_header_branch
      %19 = sbr.rel (%p17) target = $region8
    $region5: #{tpu_custom_call.1} parent=1 // loop_body
      %s21 = ssub.s32 %s16, 1
      %s22 = ssub.s32 %s16, 2
      %s29 = sadd.s32 1, %s24
      %p30 = scmp.ge.s32.totalorder %s29, 4
      %s31 = scalar_select %p30, 0, %s29
      %s32 = sadd.s32 1, %s23
      %s33 = scalar_select %p30, %s32, %s23
      %p34 = scmp.ge.s32.totalorder %s33, 2
      %s35 = scalar_select %p34, 0, %s33
      %s36 = ssub.s32 %s23, %s35
      %p37 = scmp.eq.s32.totalorder %s36, 0
      %s39 = sadd.s32 %s38, 1
      %s40 = scalar_select %p37, %s38, %s39
      %p43 = pneg %p37
      %p44 = scmp.eq.s32.totalorder %s16, 7
      %p45 = por %p43, %p44
      %p46 = scmp.ne.s32.totalorder %s38, %s41
      %p47 = scmp.eq.s32.totalorder %s16, 0
      %p48 = por %p46, %p47
      %p49 = scmp.ne.s32.totalorder %s38, %s41
      %p50 = scmp.eq.s32.totalorder %s21, 7
      %p51 = por %p49, %p50
      %p52 = scmp.ne.s32.totalorder %s41, %s42
      %p53 = scmp.eq.s32.totalorder %s21, 0
      %p54 = por %p52, %p53
      %p55 = scmp.ne.s32.totalorder %s41, %s42
      %p56 = scmp.eq.s32.totalorder %s22, 7
      %p57 = por %p55, %p56
      %p59 = scmp.ne.s32.totalorder %s42, %s58
      %p60 = scmp.eq.s32.totalorder %s22, 0
      %p61 = por %p59, %p60
      %s63 = sadd.s32 %s62, 1
      %p66 = scmp.eq.s32.totalorder %s16, 7
      %p67 = scmp.ne.s32.totalorder %s62, %s64
      %p68 = scmp.eq.s32.totalorder %s16, 0
      %p69 = por %p67, %p68
      %p70 = scmp.ne.s32.totalorder %s62, %s64
      %p71 = scmp.eq.s32.totalorder %s21, 7
      %p72 = por %p70, %p71
      %p73 = scmp.ne.s32.totalorder %s64, %s65
      %p74 = scmp.eq.s32.totalorder %s21, 0
      %p75 = por %p73, %p74
      %p76 = scmp.ne.s32.totalorder %s64, %s65
      %p77 = scmp.eq.s32.totalorder %s22, 7
      %p78 = por %p76, %p77
      %p80 = scmp.ne.s32.totalorder %s65, %s79
      %p81 = scmp.eq.s32.totalorder %s22, 0
      %p82 = por %p80, %p81
      %s84 = sadd.s32 %s83, 1
      %p87 = scmp.eq.s32.totalorder %s16, 7
      %p88 = scmp.ne.s32.totalorder %s83, %s85
      %p89 = scmp.eq.s32.totalorder %s16, 0
      %p90 = por %p88, %p89
      %p91 = scmp.ne.s32.totalorder %s83, %s85
      %p92 = scmp.eq.s32.totalorder %s21, 7
      %p93 = por %p91, %p92
      %p94 = scmp.ne.s32.totalorder %s85, %s86
      %p95 = scmp.eq.s32.totalorder %s21, 0
      %p96 = por %p94, %p95
      %p97 = scmp.ne.s32.totalorder %s85, %s86
      %p98 = scmp.eq.s32.totalorder %s22, 7
      %p99 = por %p97, %p98
      %p101 = scmp.ne.s32.totalorder %s86, %s100
      %p102 = scmp.eq.s32.totalorder %s22, 0
      %p103 = por %p101, %p102
      %s105 = sadd.s32 %s104, 1
      %p108 = scmp.eq.s32.totalorder %s16, 7
      %p109 = scmp.ne.s32.totalorder %s104, %s106
      %p110 = scmp.eq.s32.totalorder %s16, 0
      %p111 = por %p109, %p110
      %p112 = scmp.ne.s32.totalorder %s104, %s106
      %p113 = scmp.eq.s32.totalorder %s21, 7
      %p114 = por %p112, %p113
      %p115 = scmp.ne.s32.totalorder %s106, %s107
      %p116 = scmp.eq.s32.totalorder %s21, 0
      %p117 = por %p115, %p116
      %p118 = scmp.ne.s32.totalorder %s106, %s107
      %p119 = scmp.eq.s32.totalorder %s22, 7
      %p120 = por %p118, %p119
      %p122 = scmp.ne.s32.totalorder %s107, %s121
      %p123 = scmp.eq.s32.totalorder %s22, 0
      %p124 = por %p122, %p123
      %s125 = ssub.s32 %s23, %s35
      %s126 = ssub.s32 %s24, %s31
      %s127 = sor.u32 %s125, %s126
      %p128 = scmp.eq.s32.totalorder %s127, 0
      %s130 = sadd.s32 %s129, 1
      %s131 = scalar_select %p128, %s129, %s130
      %p134 = pneg %p128
      %p135 = scmp.eq.s32.totalorder %s16, 7
      %p136 = por %p134, %p135
      %p137 = scmp.ne.s32.totalorder %s129, %s132
      %p138 = scmp.eq.s32.totalorder %s16, 0
      %p139 = por %p137, %p138
      %p140 = scmp.ne.s32.totalorder %s129, %s132
      %p141 = scmp.eq.s32.totalorder %s21, 7
      %p142 = por %p140, %p141
      %p143 = scmp.ne.s32.totalorder %s132, %s133
      %p144 = scmp.eq.s32.totalorder %s21, 0
      %p145 = por %p143, %p144
      %p146 = scmp.ne.s32.totalorder %s132, %s133
      %p147 = scmp.eq.s32.totalorder %s22, 7
      %p148 = por %p146, %p147
      %p150 = scmp.ne.s32.totalorder %s133, %s149
      %p151 = scmp.eq.s32.totalorder %s22, 0
      %p152 = por %p150, %p151
      %p153 = scmp.le.s32.totalorder 1, %s16
      %p154 = scmp.lt.s32.totalorder %s16, 9
      %p155 = pnand %p153, %p154
      %p156 = pneg %p155
      // Predicated region
      $region9: #{tpu_custom_call.1} parent=5 // pred_check
        _
      $region10: #{tpu_custom_call.1} parent=5 // pred_check_branch
        %158 = sbr.rel (%p155) target = $region12
      $region11: #{tpu_custom_call.1} parent=5 // pred_region
        %s159 = ssub.s32 %s16, 1
        // Predicated region
        $region13: #{tpu_custom_call.1} parent=11 // pred_check
          %p160 = pneg %p75
        $region14: #{tpu_custom_call.1} parent=11 // pred_check_branch
          %162 = sbr.rel (%p160) target = $region16
        $region15: #{tpu_custom_call.1} parent=11 // pred_region
          _
        $region16: #{tpu_custom_call.1} parent=11 // pred_fallthru
          _
        // Predicated region
        $region17: #{tpu_custom_call.1} parent=11 // pred_check
          %p163 = pneg %p96
        $region18: #{tpu_custom_call.1} parent=11 // pred_check_branch
          %165 = sbr.rel (%p163) target = $region20
        $region19: #{tpu_custom_call.1} parent=11 // pred_region
          _
        $region20: #{tpu_custom_call.1} parent=11 // pred_fallthru
          _
        // Predicated region
        $region21: #{tpu_custom_call.1} parent=11 // pred_check
          %p166 = pneg %p117
        $region22: #{tpu_custom_call.1} parent=11 // pred_check_branch
          %168 = sbr.rel (%p166) target = $region24
        $region23: #{tpu_custom_call.1} parent=11 // pred_region
          _
        $region24: #{tpu_custom_call.1} parent=11 // pred_fallthru
          _
      $region12: #{tpu_custom_call.1} parent=5 // pred_fallthru
        _
      %p169 = scmp.lt.s32.totalorder %s16, 8
      // Predicated region
      $region25: #{tpu_custom_call.1} parent=5 // pred_check
        %p170 = pneg %p169
      $region26: #{tpu_custom_call.1} parent=5 // pred_check_branch
        %172 = sbr.rel (%p170) target = $region28
      $region27: #{tpu_custom_call.1} parent=5 // pred_region
        // Predicated region
        $region29: #{tpu_custom_call.1} parent=27 // pred_check
          %p173 = pneg %p48
        $region30: #{tpu_custom_call.1} parent=27 // pred_check_branch
          %175 = sbr.rel (%p173) target = $region32
        $region31: #{tpu_custom_call.1} parent=27 // pred_region
          %s176 = sand.u32 %s38, 1
          %s177 = scalar_lea.sflag [#allocation4], %s176
          %s178 = sand.u32 %s38, 1
          %s179 = smul.addr %s178, 512
          %s180 = scalar_lea.vmem [#allocation3], %s179
          %s182 = ssub.s32 8192, 8192
          %183 = vsyncadd %s177, %s182
          %s184 = smul.addr %s23, 64
          %s185 = smul.addr %s184, 128
          %s186 = scalar_lea.hbm %s0, %s185
          %s187 = sshll.u32 %s180, 4
          %s188 = int_to_ptr.vmem [resolvable:$true] %s187
          %193 = dma.hbm_to_vmem [thread:$0]  %s186, 8192, %s188, %s177, 1024, 1024, 64
        $region32: #{tpu_custom_call.1} parent=27 // pred_fallthru
          _
      $region28: #{tpu_custom_call.1} parent=5 // pred_fallthru
        _
      %p194 = scmp.le.s32.totalorder 1, %s16
      %p195 = scmp.lt.s32.totalorder %s16, 9
      %p196 = pnand %p194, %p195
      %p197 = pneg %p196
      // Predicated region
      $region33: #{tpu_custom_call.1} parent=5 // pred_check
        _
      $region34: #{tpu_custom_call.1} parent=5 // pred_check_branch
        %199 = sbr.rel (%p196) target = $region36
      $region35: #{tpu_custom_call.1} parent=5 // pred_region
        %s200 = ssub.s32 %s16, 1
        %s201 = sand.u32 %s41, 1
        %s202 = scalar_lea.sflag [#allocation4], %s201
        %s203 = sand.u32 %s41, 1
        %s204 = smul.addr %s203, 512
        %s205 = scalar_lea.vmem [#allocation3], %s204
        // Predicated region
        $region37: #{tpu_custom_call.1} parent=35 // pred_check
          %p206 = pneg %p54
        $region38: #{tpu_custom_call.1} parent=35 // pred_check_branch
          %208 = sbr.rel (%p206) target = $region40
        $region39: #{tpu_custom_call.1} parent=35 // pred_region
          %209 = dma.done %s202, 8192
        $region40: #{tpu_custom_call.1} parent=35 // pred_fallthru
          _
        %s210 = sand.u32 %s41, 1
        %s211 = scalar_lea.sflag [#allocation4], %s210
        %s212 = sand.u32 %s41, 1
        %s213 = smul.addr %s212, 512
        %s214 = scalar_lea.vmem [#allocation3], %s213
        %p215 = pneg %p54
        %p216 = pneg %p51
        %p217 = pneg %p75
        %p218 = pneg %p72
        %p219 = pneg %p96
        %p220 = pneg %p93
        %p221 = pneg %p117
        %p222 = pneg %p114
        %p223 = pneg %p145
        %p224 = pneg %p142
        %s225 = sand.u32 %s132, 1
        %s226 = scalar_lea.sflag [#allocation5], %s225
        %s227 = sand.u32 %s132, 1
        %s228 = smul.addr %s227, 128
        %s229 = scalar_lea.vmem [#allocation6], %s228
        %s230 = smul.u32 2, %s26
        %s231 = smul.u32 %s26, 256
        %s232 = sshra.s32 %s231, 7
        %s233 = sand.u32 %s231, 127
        %s234 = smul.addr %s232, 8
        %s235 = scalar_lea.vmem %s205, %s234 [#allocation3]
        %v236 = vld [vmem:[%s235] sm:$0xff]
        %v237 = vld [vmem:[%s235 + $0x8] sm:$0xff]
        %v238 = vld [vmem:[%s235 + $0x40] sm:$0xff]
        %v239 = vld [vmem:[%s235 + $0x48] sm:$0xff]
        %v240 = vld [vmem:[%s235 + $0x80] sm:$0xff]
        %v241 = vld [vmem:[%s235 + $0x88] sm:$0xff]
        %v242 = vld [vmem:[%s235 + $0xc0] sm:$0xff]
        %v243 = vld [vmem:[%s235 + $0xc8] sm:$0xff]
        %v244 = vld [vmem:[%s235 + $0x100] sm:$0xff]
        %v245 = vld [vmem:[%s235 + $0x108] sm:$0xff]
        %v246 = vld [vmem:[%s235 + $0x140] sm:$0xff]
        %v247 = vld [vmem:[%s235 + $0x148] sm:$0xff]
        %v248 = vld [vmem:[%s235 + $0x180] sm:$0xff]
        %v249 = vld [vmem:[%s235 + $0x188] sm:$0xff]
        %v250 = vld [vmem:[%s235 + $0x1c0] sm:$0xff]
        %v251 = vld [vmem:[%s235 + $0x1c8] sm:$0xff]
        %268 = vrot.lane.b32.xlu0 %v236, 33
        %v269 = vpop.permute.xlu0 %268
        %270 = vrot.lane.b32.xlu0 %v237, 33
        %v271 = vpop.permute.xlu0 %270
        %272 = vrot.lane.b32.xlu0 %v238, 33
        %v273 = vpop.permute.xlu0 %272
        %274 = vrot.lane.b32.xlu0 %v239, 33
        %v275 = vpop.permute.xlu0 %274
        %276 = vrot.lane.b32.xlu0 %v240, 33
        %v277 = vpop.permute.xlu0 %276
        %278 = vrot.lane.b32.xlu0 %v241, 33
        %v279 = vpop.permute.xlu0 %278
        %280 = vrot.lane.b32.xlu0 %v242, 33
        %v281 = vpop.permute.xlu0 %280
        %282 = vrot.lane.b32.xlu0 %v243, 33
        %v283 = vpop.permute.xlu0 %282
        %284 = vrot.lane.b32.xlu0 %v244, 33
        %v285 = vpop.permute.xlu0 %284
        %286 = vrot.lane.b32.xlu0 %v245, 33
        %v287 = vpop.permute.xlu0 %286
        %288 = vrot.lane.b32.xlu0 %v246, 33
        %v289 = vpop.permute.xlu0 %288
        %290 = vrot.lane.b32.xlu0 %v247, 33
        %v291 = vpop.permute.xlu0 %290
        %292 = vrot.lane.b32.xlu0 %v248, 33
        %v293 = vpop.permute.xlu0 %292
        %294 = vrot.lane.b32.xlu0 %v249, 33
        %v295 = vpop.permute.xlu0 %294
        %296 = vrot.lane.b32.xlu0 %v250, 33
        %v297 = vpop.permute.xlu0 %296
        %298 = vrot.lane.b32.xlu0 %v251, 33
        %v299 = vpop.permute.xlu0 %298
        %vm300 = vcmask 269312
        %v301 = vsel %vm300, %v269, %v271
        %v302 = vsel %vm300, %v273, %v275
        %v303 = vsel %vm300, %v277, %v279
        %v304 = vsel %vm300, %v281, %v283
        %v305 = vsel %vm300, %v285, %v287
        %v306 = vsel %vm300, %v289, %v291
        %v307 = vsel %vm300, %v293, %v295
        %v308 = vsel %vm300, %v297, %v299
        %vm333 = vcmask 1047816
        %334 = vst.msk [vmem:[#allocation2] sm:$0xff] %vm333, %v269
        %335 = vst [vmem:[#allocation2 + $0x8] sm:$0xff] %v301
        %336 = vst.msk [vmem:[#allocation2 + $0x10] sm:$0xff] %vm300, %v271
        %337 = vst.msk [vmem:[#allocation2 + $0x18] sm:$0xff] %vm333, %v273
        %338 = vst [vmem:[#allocation2 + $0x20] sm:$0xff] %v302
        %339 = vst.msk [vmem:[#allocation2 + $0x28] sm:$0xff] %vm300, %v275
        %340 = vst.msk [vmem:[#allocation2 + $0x30] sm:$0xff] %vm333, %v277
        %341 = vst [vmem:[#allocation2 + $0x38] sm:$0xff] %v303
        %342 = vst.msk [vmem:[#allocation2 + $0x40] sm:$0xff] %vm300, %v279
        %343 = vst.msk [vmem:[#allocation2 + $0x48] sm:$0xff] %vm333, %v281
        %344 = vst [vmem:[#allocation2 + $0x50] sm:$0xff] %v304
        %345 = vst.msk [vmem:[#allocation2 + $0x58] sm:$0xff] %vm300, %v283
        %346 = vst.msk [vmem:[#allocation2 + $0x60] sm:$0xff] %vm333, %v285
        %347 = vst [vmem:[#allocation2 + $0x68] sm:$0xff] %v305
        %348 = vst.msk [vmem:[#allocation2 + $0x70] sm:$0xff] %vm300, %v287
        %349 = vst.msk [vmem:[#allocation2 + $0x78] sm:$0xff] %vm333, %v289
        %350 = vst [vmem:[#allocation2 + $0x80] sm:$0xff] %v306
        %351 = vst.msk [vmem:[#allocation2 + $0x88] sm:$0xff] %vm300, %v291
        %352 = vst.msk [vmem:[#allocation2 + $0x90] sm:$0xff] %vm333, %v293
        %353 = vst [vmem:[#allocation2 + $0x98] sm:$0xff] %v307
        %354 = vst.msk [vmem:[#allocation2 + $0xa0] sm:$0xff] %vm300, %v295
        %355 = vst.msk [vmem:[#allocation2 + $0xa8] sm:$0xff] %vm333, %v297
        %356 = vst [vmem:[#allocation2 + $0xb0] sm:$0xff] %v308
        %357 = vst.msk [vmem:[#allocation2 + $0xb8] sm:$0xff] %vm300, %v299
        %vm358 = vcmask 7168
        %359 = vst.msk [vmem:[#allocation2] sm:$0xff] %vm358, 0.0
        %360 = vst.msk [vmem:[#allocation2 + $0x18] sm:$0xff] %vm358, 0.0
        %361 = vst.msk [vmem:[#allocation2 + $0x30] sm:$0xff] %vm358, 0.0
        %362 = vst.msk [vmem:[#allocation2 + $0x48] sm:$0xff] %vm358, 0.0
        %363 = vst.msk [vmem:[#allocation2 + $0x60] sm:$0xff] %vm358, 0.0
        %364 = vst.msk [vmem:[#allocation2 + $0x78] sm:$0xff] %vm358, 0.0
        %365 = vst.msk [vmem:[#allocation2 + $0x90] sm:$0xff] %vm358, 0.0
        %366 = vst.msk [vmem:[#allocation2 + $0xa8] sm:$0xff] %vm358, 0.0
        %vm367 = vcmask 540168
        %368 = vst.msk [vmem:[#allocation2 + $0x10] sm:$0xff] %vm367, 0.0
        %369 = vst.msk [vmem:[#allocation2 + $0x28] sm:$0xff] %vm367, 0.0
        %370 = vst.msk [vmem:[#allocation2 + $0x40] sm:$0xff] %vm367, 0.0
        %371 = vst.msk [vmem:[#allocation2 + $0x58] sm:$0xff] %vm367, 0.0
        %372 = vst.msk [vmem:[#allocation2 + $0x70] sm:$0xff] %vm367, 0.0
        %373 = vst.msk [vmem:[#allocation2 + $0x88] sm:$0xff] %vm367, 0.0
        %374 = vst.msk [vmem:[#allocation2 + $0xa0] sm:$0xff] %vm367, 0.0
        %375 = vst.msk [vmem:[#allocation2 + $0xb8] sm:$0xff] %vm367, 0.0
        %p376 = scmp.eq.s32.totalorder %s26, 0
        // Predicated region
        $region41: #{tpu_custom_call.1} parent=35 // pred_check
          %p377 = pneg %p376
        $region42: #{tpu_custom_call.1} parent=35 // pred_check_branch
          %379 = sbr.rel (%p377) target = $region44
        $region43: #{tpu_custom_call.1} parent=35 // pred_region
          %vm380 = vcmask 269320
          %381 = vst.msk [vmem:[#allocation2] sm:$0xff] %vm380, 0.0
          %382 = vst.msk [vmem:[#allocation2 + $0x18] sm:$0xff] %vm380, 0.0
          %383 = vst.msk [vmem:[#allocation2 + $0x30] sm:$0xff] %vm380, 0.0
          %384 = vst.msk [vmem:[#allocation2 + $0x48] sm:$0xff] %vm380, 0.0
          %385 = vst.msk [vmem:[#allocation2 + $0x60] sm:$0xff] %vm380, 0.0
          %386 = vst.msk [vmem:[#allocation2 + $0x78] sm:$0xff] %vm380, 0.0
          %387 = vst.msk [vmem:[#allocation2 + $0x90] sm:$0xff] %vm380, 0.0
          %388 = vst.msk [vmem:[#allocation2 + $0xa8] sm:$0xff] %vm380, 0.0
        $region44: #{tpu_custom_call.1} parent=35 // pred_fallthru
          _
        %p389 = scmp.gt.s32.totalorder %s26, 0
        // Predicated region
        $region45: #{tpu_custom_call.1} parent=35 // pred_check
          %p390 = pneg %p389
        $region46: #{tpu_custom_call.1} parent=35 // pred_check_branch
          %392 = sbr.rel (%p390) target = $region48
        $region47: #{tpu_custom_call.1} parent=35 // pred_region
          %s393 = ssub.s32 %s231, 128
          %s394 = sshra.s32 %s393, 7
          %s395 = sand.u32 %s393, 127
          %s396 = smul.addr %s394, 8
          %s397 = scalar_lea.vmem %s205, %s396 [#allocation3]
          %v398 = vld [vmem:[%s397] sm:$0xff]
          %v399 = vld [vmem:[%s397 + $0x40] sm:$0xff]
          %v400 = vld [vmem:[%s397 + $0x80] sm:$0xff]
          %v401 = vld [vmem:[%s397 + $0xc0] sm:$0xff]
          %v402 = vld [vmem:[%s397 + $0x100] sm:$0xff]
          %v403 = vld [vmem:[%s397 + $0x140] sm:$0xff]
          %v404 = vld [vmem:[%s397 + $0x180] sm:$0xff]
          %v405 = vld [vmem:[%s397 + $0x1c0] sm:$0xff]
          %414 = vrot.lane.b32.xlu0 %v398, 33
          %v415 = vpop.permute.xlu0 %414
          %416 = vrot.lane.b32.xlu0 %v399, 33
          %v417 = vpop.permute.xlu0 %416
          %418 = vrot.lane.b32.xlu0 %v400, 33
          %v419 = vpop.permute.xlu0 %418
          %420 = vrot.lane.b32.xlu0 %v401, 33
          %v421 = vpop.permute.xlu0 %420
          %422 = vrot.lane.b32.xlu0 %v402, 33
          %v423 = vpop.permute.xlu0 %422
          %424 = vrot.lane.b32.xlu0 %v403, 33
          %v425 = vpop.permute.xlu0 %424
          %426 = vrot.lane.b32.xlu0 %v404, 33
          %v427 = vpop.permute.xlu0 %426
          %428 = vrot.lane.b32.xlu0 %v405, 33
          %v429 = vpop.permute.xlu0 %428
          %vm438 = vcmask 269320
          %439 = vst.msk [vmem:[#allocation2] sm:$0xff] %vm438, %v415
          %440 = vst.msk [vmem:[#allocation2 + $0x18] sm:$0xff] %vm438, %v417
          %441 = vst.msk [vmem:[#allocation2 + $0x30] sm:$0xff] %vm438, %v419
          %442 = vst.msk [vmem:[#allocation2 + $0x48] sm:$0xff] %vm438, %v421
          %443 = vst.msk [vmem:[#allocation2 + $0x60] sm:$0xff] %vm438, %v423
          %444 = vst.msk [vmem:[#allocation2 + $0x78] sm:$0xff] %vm438, %v425
          %445 = vst.msk [vmem:[#allocation2 + $0x90] sm:$0xff] %vm438, %v427
          %446 = vst.msk [vmem:[#allocation2 + $0xa8] sm:$0xff] %vm438, %v429
        $region48: #{tpu_custom_call.1} parent=35 // pred_fallthru
          _
        %p447 = scmp.eq.s32.totalorder %s26, 3
        // Predicated region
        $region49: #{tpu_custom_call.1} parent=35 // pred_check
          %p448 = pneg %p447
        $region50: #{tpu_custom_call.1} parent=35 // pred_check_branch
          %450 = sbr.rel (%p448) target = $region52
        $region51: #{tpu_custom_call.1} parent=35 // pred_region
          %vm451 = vcmask 531720
          %452 = vst.msk [vmem:[#allocation2 + $0x10] sm:$0xff] %vm451, 0.0
          %453 = vst.msk [vmem:[#allocation2 + $0x28] sm:$0xff] %vm451, 0.0
          %454 = vst.msk [vmem:[#allocation2 + $0x40] sm:$0xff] %vm451, 0.0
          %455 = vst.msk [vmem:[#allocation2 + $0x58] sm:$0xff] %vm451, 0.0
          %456 = vst.msk [vmem:[#allocation2 + $0x70] sm:$0xff] %vm451, 0.0
          %457 = vst.msk [vmem:[#allocation2 + $0x88] sm:$0xff] %vm451, 0.0
          %458 = vst.msk [vmem:[#allocation2 + $0xa0] sm:$0xff] %vm451, 0.0
          %459 = vst.msk [vmem:[#allocation2 + $0xb8] sm:$0xff] %vm451, 0.0
        $region52: #{tpu_custom_call.1} parent=35 // pred_fallthru
          _
        %p460 = scmp.lt.s32.totalorder %s26, 3
        // Predicated region
        $region53: #{tpu_custom_call.1} parent=35 // pred_check
          %p461 = pneg %p460
        $region54: #{tpu_custom_call.1} parent=35 // pred_check_branch
          %463 = sbr.rel (%p461) target = $region56
        $region55: #{tpu_custom_call.1} parent=35 // pred_region
          %s464 = sadd.s32 %s26, 1
          %s465 = smul.u32 %s464, 256
          %s466 = sshra.s32 %s465, 7
          %s467 = sand.u32 %s465, 127
          %s468 = smul.addr %s466, 8
          %s469 = scalar_lea.vmem %s205, %s468 [#allocation3]
          %v470 = vld [vmem:[%s469] sm:$0xff]
          %v471 = vld [vmem:[%s469 + $0x40] sm:$0xff]
          %v472 = vld [vmem:[%s469 + $0x80] sm:$0xff]
          %v473 = vld [vmem:[%s469 + $0xc0] sm:$0xff]
          %v474 = vld [vmem:[%s469 + $0x100] sm:$0xff]
          %v475 = vld [vmem:[%s469 + $0x140] sm:$0xff]
          %v476 = vld [vmem:[%s469 + $0x180] sm:$0xff]
          %v477 = vld [vmem:[%s469 + $0x1c0] sm:$0xff]
          %486 = vrot.lane.b32.xlu0 %v470, 33
          %v487 = vpop.permute.xlu0 %486
          %488 = vrot.lane.b32.xlu0 %v471, 33
          %v489 = vpop.permute.xlu0 %488
          %490 = vrot.lane.b32.xlu0 %v472, 33
          %v491 = vpop.permute.xlu0 %490
          %492 = vrot.lane.b32.xlu0 %v473, 33
          %v493 = vpop.permute.xlu0 %492
          %494 = vrot.lane.b32.xlu0 %v474, 33
          %v495 = vpop.permute.xlu0 %494
          %496 = vrot.lane.b32.xlu0 %v475, 33
          %v497 = vpop.permute.xlu0 %496
          %498 = vrot.lane.b32.xlu0 %v476, 33
          %v499 = vpop.permute.xlu0 %498
          %500 = vrot.lane.b32.xlu0 %v477, 33
          %v501 = vpop.permute.xlu0 %500
          %vm510 = vcmask 531720
          %511 = vst.msk [vmem:[#allocation2 + $0x10] sm:$0xff] %vm510, %v487
          %512 = vst.msk [vmem:[#allocation2 + $0x28] sm:$0xff] %vm510, %v489
          %513 = vst.msk [vmem:[#allocation2 + $0x40] sm:$0xff] %vm510, %v491
          %514 = vst.msk [vmem:[#allocation2 + $0x58] sm:$0xff] %vm510, %v493
          %515 = vst.msk [vmem:[#allocation2 + $0x70] sm:$0xff] %vm510, %v495
          %516 = vst.msk [vmem:[#allocation2 + $0x88] sm:$0xff] %vm510, %v497
          %517 = vst.msk [vmem:[#allocation2 + $0xa0] sm:$0xff] %vm510, %v499
          %518 = vst.msk [vmem:[#allocation2 + $0xb8] sm:$0xff] %vm510, %v501
        $region56: #{tpu_custom_call.1} parent=35 // pred_fallthru
          _
        %v519 = vld [vmem:[%s1] sm:$0xff]
        %v520 = vld [vmem:[%s1 + $0x8] sm:$0xff]
        %v521 = vld [vmem:[%s1 + $0x10] sm:$0xff]
        %v522 = vld [vmem:[%s1 + $0x18] sm:$0xff]
        %v523 = vld [vmem:[%s1 + $0x20] sm:$0xff]
        %v524 = vld [vmem:[%s1 + $0x28] sm:$0xff]
        %v525 = vld [vmem:[%s1 + $0x30] sm:$0xff]
        %v526 = vld [vmem:[%s1 + $0x38] sm:$0xff]
        %v527 = vlaneseq
        %v528 = vand.u32 %v527, 127
        %v529 = vadd.s32 %v528, 128
        %v530 = vand.u32 %v528, 31
        %v531 = vand.u32 %v529, 31
        %vm532 = vcmp.ne.s32.totalorder %v530, 0
        %vm533 = vcmp.ne.s32.totalorder %v531, 0
        %vm534 = vcmp.ne.s32.totalorder %v530, 31
        %vm535 = vcmp.ne.s32.totalorder %v531, 31
        %v536 = vld [vmem:[#allocation2] sm:$0xff]
        %v537 = vld [vmem:[#allocation2 + $0x8] sm:$0xff]
        %v538 = vld [vmem:[#allocation2 + $0x18] sm:$0xff]
        %v539 = vld [vmem:[#allocation2 + $0x20] sm:$0xff]
        %v540 = vld [vmem:[#allocation2 + $0x30] sm:$0xff]
        %v541 = vld [vmem:[#allocation2 + $0x38] sm:$0xff]
        %v542 = vld [vmem:[#allocation2 + $0x48] sm:$0xff]
        %v543 = vld [vmem:[#allocation2 + $0x50] sm:$0xff]
        %v544 = vld [vmem:[#allocation2 + $0x60] sm:$0xff]
        %v545 = vld [vmem:[#allocation2 + $0x68] sm:$0xff]
        %v546 = vld [vmem:[#allocation2 + $0x78] sm:$0xff]
        %v547 = vld [vmem:[#allocation2 + $0x80] sm:$0xff]
        %v548 = vld [vmem:[#allocation2 + $0x90] sm:$0xff]
        %v549 = vld [vmem:[#allocation2 + $0x98] sm:$0xff]
        %v550 = vld [vmem:[#allocation2 + $0xa8] sm:$0xff]
        %v551 = vld [vmem:[#allocation2 + $0xb0] sm:$0xff]
        %v552 = vsel %vm532, 1, 0
        %v553 = vsel %vm533, 1, 0
        %vm554 = vcmp.eq.s32.totalorder %v552, 1
        %vm555 = vcmp.eq.s32.totalorder %v553, 1
        %v556 = vsel %vm554, %v536, 0.0
        %v557 = vsel %vm555, %v537, 0.0
        %v558 = vsel %vm554, %v538, 0.0
        %v559 = vsel %vm555, %v539, 0.0
        %v560 = vsel %vm554, %v540, 0.0
        %v561 = vsel %vm555, %v541, 0.0
        %v562 = vsel %vm554, %v542, 0.0
        %v563 = vsel %vm555, %v543, 0.0
        %v564 = vsel %vm554, %v544, 0.0
        %v565 = vsel %vm555, %v545, 0.0
        %v566 = vsel %vm554, %v546, 0.0
        %v567 = vsel %vm555, %v547, 0.0
        %v568 = vsel %vm554, %v548, 0.0
        %v569 = vsel %vm555, %v549, 0.0
        %v570 = vsel %vm554, %v550, 0.0
        %v571 = vsel %vm555, %v551, 0.0
        %573 = vset.pattern.permute.xlu0 0
        %574 = vperm.xlu0 %573, %v519
        %v575 = vpop.permute.xlu0 %574
        %578 = vset.pattern.permute.xlu0 0
        %579 = vperm.xlu0 %578, %v520
        %v580 = vpop.permute.xlu0 %579
        %583 = vset.pattern.permute.xlu0 0
        %584 = vperm.xlu0 %583, %v521
        %v585 = vpop.permute.xlu0 %584
        %588 = vset.pattern.permute.xlu0 0
        %589 = vperm.xlu0 %588, %v522
        %v590 = vpop.permute.xlu0 %589
        %593 = vset.pattern.permute.xlu0 0
        %594 = vperm.xlu0 %593, %v523
        %v595 = vpop.permute.xlu0 %594
        %598 = vset.pattern.permute.xlu0 0
        %599 = vperm.xlu0 %598, %v524
        %v600 = vpop.permute.xlu0 %599
        %603 = vset.pattern.permute.xlu0 0
        %604 = vperm.xlu0 %603, %v525
        %v605 = vpop.permute.xlu0 %604
        %608 = vset.pattern.permute.xlu0 0
        %609 = vperm.xlu0 %608, %v526
        %v610 = vpop.permute.xlu0 %609
        %v612 = vmul.f32 %v556, %v575
        %v613 = vmul.f32 %v557, %v575
        %v614 = vmul.f32 %v558, %v580
        %v615 = vmul.f32 %v559, %v580
        %v616 = vmul.f32 %v560, %v585
        %v617 = vmul.f32 %v561, %v585
        %v618 = vmul.f32 %v562, %v590
        %v619 = vmul.f32 %v563, %v590
        %v620 = vmul.f32 %v564, %v595
        %v621 = vmul.f32 %v565, %v595
        %v622 = vmul.f32 %v566, %v600
        %v623 = vmul.f32 %v567, %v600
        %v624 = vmul.f32 %v568, %v605
        %v625 = vmul.f32 %v569, %v605
        %v626 = vmul.f32 %v570, %v610
        %v627 = vmul.f32 %v571, %v610
        %v628 = vadd.f32 %v612, 0.0
        %v629 = vadd.f32 %v613, 0.0
        %v630 = vadd.f32 %v614, 0.0
        %v631 = vadd.f32 %v615, 0.0
        %v632 = vadd.f32 %v616, 0.0
        %v633 = vadd.f32 %v617, 0.0
        %v634 = vadd.f32 %v618, 0.0
        %v635 = vadd.f32 %v619, 0.0
        %v636 = vadd.f32 %v620, 0.0
        %v637 = vadd.f32 %v621, 0.0
        %v638 = vadd.f32 %v622, 0.0
        %v639 = vadd.f32 %v623, 0.0
        %v640 = vadd.f32 %v624, 0.0
        %v641 = vadd.f32 %v625, 0.0
        %v642 = vadd.f32 %v626, 0.0
        %v643 = vadd.f32 %v627, 0.0
        %v644 = vld [vmem:[#allocation2] sm:$0xff]
        %v645 = vld [vmem:[#allocation2 + $0x8] sm:$0xff]
        %v646 = vld [vmem:[#allocation2 + $0x10] sm:$0xff]
        %v647 = vld [vmem:[#allocation2 + $0x18] sm:$0xff]
        %v648 = vld [vmem:[#allocation2 + $0x20] sm:$0xff]
        %v649 = vld [vmem:[#allocation2 + $0x28] sm:$0xff]
        %v650 = vld [vmem:[#allocation2 + $0x30] sm:$0xff]
        %v651 = vld [vmem:[#allocation2 + $0x38] sm:$0xff]
        %v652 = vld [vmem:[#allocation2 + $0x40] sm:$0xff]
        %v653 = vld [vmem:[#allocation2 + $0x48] sm:$0xff]
        %v654 = vld [vmem:[#allocation2 + $0x50] sm:$0xff]
        %v655 = vld [vmem:[#allocation2 + $0x58] sm:$0xff]
        %v656 = vld [vmem:[#allocation2 + $0x60] sm:$0xff]
        %v657 = vld [vmem:[#allocation2 + $0x68] sm:$0xff]
        %v658 = vld [vmem:[#allocation2 + $0x70] sm:$0xff]
        %v659 = vld [vmem:[#allocation2 + $0x78] sm:$0xff]
        %v660 = vld [vmem:[#allocation2 + $0x80] sm:$0xff]
        %v661 = vld [vmem:[#allocation2 + $0x88] sm:$0xff]
        %v662 = vld [vmem:[#allocation2 + $0x90] sm:$0xff]
        %v663 = vld [vmem:[#allocation2 + $0x98] sm:$0xff]
        %v664 = vld [vmem:[#allocation2 + $0xa0] sm:$0xff]
        %v665 = vld [vmem:[#allocation2 + $0xa8] sm:$0xff]
        %v666 = vld [vmem:[#allocation2 + $0xb0] sm:$0xff]
        %v667 = vld [vmem:[#allocation2 + $0xb8] sm:$0xff]
        %668 = vset.pattern.permute.xlu0 1
        %669 = vperm.xlu0 %668, %v519
        %v670 = vpop.permute.xlu0 %669
        %672 = vset.pattern.permute.xlu0 1
        %673 = vperm.xlu0 %672, %v520
        %v674 = vpop.permute.xlu0 %673
        %676 = vset.pattern.permute.xlu0 1
        %677 = vperm.xlu0 %676, %v521
        %v678 = vpop.permute.xlu0 %677
        %680 = vset.pattern.permute.xlu0 1
        %681 = vperm.xlu0 %680, %v522
        %v682 = vpop.permute.xlu0 %681
        %684 = vset.pattern.permute.xlu0 1
        %685 = vperm.xlu0 %684, %v523
        %v686 = vpop.permute.xlu0 %685
        %688 = vset.pattern.permute.xlu0 1
        %689 = vperm.xlu0 %688, %v524
        %v690 = vpop.permute.xlu0 %689
        %692 = vset.pattern.permute.xlu0 1
        %693 = vperm.xlu0 %692, %v525
        %v694 = vpop.permute.xlu0 %693
        %696 = vset.pattern.permute.xlu0 1
        %697 = vperm.xlu0 %696, %v526
        %v698 = vpop.permute.xlu0 %697
        %v700 = vmul.f32 %v644, %v670
        %v701 = vmul.f32 %v645, %v670
        %v702 = vmul.f32 %v646, %v670
        %v703 = vmul.f32 %v647, %v674
        %v704 = vmul.f32 %v648, %v674
        %v705 = vmul.f32 %v649, %v674
        %v706 = vmul.f32 %v650, %v678
        %v707 = vmul.f32 %v651, %v678
        %v708 = vmul.f32 %v652, %v678
        %v709 = vmul.f32 %v653, %v682
        %v710 = vmul.f32 %v654, %v682
        %v711 = vmul.f32 %v655, %v682
        %v712 = vmul.f32 %v656, %v686
        %v713 = vmul.f32 %v657, %v686
        %v714 = vmul.f32 %v658, %v686
        %v715 = vmul.f32 %v659, %v690
        %v716 = vmul.f32 %v660, %v690
        %v717 = vmul.f32 %v661, %v690
        %v718 = vmul.f32 %v662, %v694
        %v719 = vmul.f32 %v663, %v694
        %v720 = vmul.f32 %v664, %v694
        %v721 = vmul.f32 %v665, %v698
        %v722 = vmul.f32 %v666, %v698
        %v723 = vmul.f32 %v667, %v698
        %748 = vrot.lane.b32.xlu0 %v700, 127
        %v749 = vpop.permute.xlu0 %748
        %750 = vrot.lane.b32.xlu0 %v701, 127
        %v751 = vpop.permute.xlu0 %750
        %752 = vrot.lane.b32.xlu0 %v702, 127
        %v753 = vpop.permute.xlu0 %752
        %754 = vrot.lane.b32.xlu0 %v703, 127
        %v755 = vpop.permute.xlu0 %754
        %756 = vrot.lane.b32.xlu0 %v704, 127
        %v757 = vpop.permute.xlu0 %756
        %758 = vrot.lane.b32.xlu0 %v705, 127
        %v759 = vpop.permute.xlu0 %758
        %760 = vrot.lane.b32.xlu0 %v706, 127
        %v761 = vpop.permute.xlu0 %760
        %762 = vrot.lane.b32.xlu0 %v707, 127
        %v763 = vpop.permute.xlu0 %762
        %764 = vrot.lane.b32.xlu0 %v708, 127
        %v765 = vpop.permute.xlu0 %764
        %766 = vrot.lane.b32.xlu0 %v709, 127
        %v767 = vpop.permute.xlu0 %766
        %768 = vrot.lane.b32.xlu0 %v710, 127
        %v769 = vpop.permute.xlu0 %768
        %770 = vrot.lane.b32.xlu0 %v711, 127
        %v771 = vpop.permute.xlu0 %770
        %772 = vrot.lane.b32.xlu0 %v712, 127
        %v773 = vpop.permute.xlu0 %772
        %774 = vrot.lane.b32.xlu0 %v713, 127
        %v775 = vpop.permute.xlu0 %774
        %776 = vrot.lane.b32.xlu0 %v714, 127
        %v777 = vpop.permute.xlu0 %776
        %778 = vrot.lane.b32.xlu0 %v715, 127
        %v779 = vpop.permute.xlu0 %778
        %780 = vrot.lane.b32.xlu0 %v716, 127
        %v781 = vpop.permute.xlu0 %780
        %782 = vrot.lane.b32.xlu0 %v717, 127
        %v783 = vpop.permute.xlu0 %782
        %784 = vrot.lane.b32.xlu0 %v718, 127
        %v785 = vpop.permute.xlu0 %784
        %786 = vrot.lane.b32.xlu0 %v719, 127
        %v787 = vpop.permute.xlu0 %786
        %788 = vrot.lane.b32.xlu0 %v720, 127
        %v789 = vpop.permute.xlu0 %788
        %790 = vrot.lane.b32.xlu0 %v721, 127
        %v791 = vpop.permute.xlu0 %790
        %792 = vrot.lane.b32.xlu0 %v722, 127
        %v793 = vpop.permute.xlu0 %792
        %794 = vrot.lane.b32.xlu0 %v723, 127
        %v795 = vpop.permute.xlu0 %794
        %vm796 = vcmask 1039360
        %v797 = vsel %vm796, %v749, %v751
        %v798 = vsel %vm796, %v751, %v753
        %v799 = vsel %vm796, %v755, %v757
        %v800 = vsel %vm796, %v757, %v759
        %v801 = vsel %vm796, %v761, %v763
        %v802 = vsel %vm796, %v763, %v765
        %v803 = vsel %vm796, %v767, %v769
        %v804 = vsel %vm796, %v769, %v771
        %v805 = vsel %vm796, %v773, %v775
        %v806 = vsel %vm796, %v775, %v777
        %v807 = vsel %vm796, %v779, %v781
        %v808 = vsel %vm796, %v781, %v783
        %v809 = vsel %vm796, %v785, %v787
        %v810 = vsel %vm796, %v787, %v789
        %v811 = vsel %vm796, %v791, %v793
        %v812 = vsel %vm796, %v793, %v795
        %v829 = vadd.f32 %v628, %v797
        %v830 = vadd.f32 %v629, %v798
        %v831 = vadd.f32 %v630, %v799
        %v832 = vadd.f32 %v631, %v800
        %v833 = vadd.f32 %v632, %v801
        %v834 = vadd.f32 %v633, %v802
        %v835 = vadd.f32 %v634, %v803
        %v836 = vadd.f32 %v635, %v804
        %v837 = vadd.f32 %v636, %v805
        %v838 = vadd.f32 %v637, %v806
        %v839 = vadd.f32 %v638, %v807
        %v840 = vadd.f32 %v639, %v808
        %v841 = vadd.f32 %v640, %v809
        %v842 = vadd.f32 %v641, %v810
        %v843 = vadd.f32 %v642, %v811
        %v844 = vadd.f32 %v643, %v812
        %v845 = vsel %vm534, 1, 0
        %v846 = vsel %vm535, 1, 0
        %vm847 = vcmp.eq.s32.totalorder %v845, 1
        %vm848 = vcmp.eq.s32.totalorder %v846, 1
        %873 = vrot.lane.b32.xlu0 %v644, 126
        %v874 = vpop.permute.xlu0 %873
        %875 = vrot.lane.b32.xlu0 %v645, 126
        %v876 = vpop.permute.xlu0 %875
        %877 = vrot.lane.b32.xlu0 %v646, 126
        %v878 = vpop.permute.xlu0 %877
        %879 = vrot.lane.b32.xlu0 %v647, 126
        %v880 = vpop.permute.xlu0 %879
        %881 = vrot.lane.b32.xlu0 %v648, 126
        %v882 = vpop.permute.xlu0 %881
        %883 = vrot.lane.b32.xlu0 %v649, 126
        %v884 = vpop.permute.xlu0 %883
        %885 = vrot.lane.b32.xlu0 %v650, 126
        %v886 = vpop.permute.xlu0 %885
        %887 = vrot.lane.b32.xlu0 %v651, 126
        %v888 = vpop.permute.xlu0 %887
        %889 = vrot.lane.b32.xlu0 %v652, 126
        %v890 = vpop.permute.xlu0 %889
        %891 = vrot.lane.b32.xlu0 %v653, 126
        %v892 = vpop.permute.xlu0 %891
        %893 = vrot.lane.b32.xlu0 %v654, 126
        %v894 = vpop.permute.xlu0 %893
        %895 = vrot.lane.b32.xlu0 %v655, 126
        %v896 = vpop.permute.xlu0 %895
        %897 = vrot.lane.b32.xlu0 %v656, 126
        %v898 = vpop.permute.xlu0 %897
        %899 = vrot.lane.b32.xlu0 %v657, 126
        %v900 = vpop.permute.xlu0 %899
        %901 = vrot.lane.b32.xlu0 %v658, 126
        %v902 = vpop.permute.xlu0 %901
        %903 = vrot.lane.b32.xlu0 %v659, 126
        %v904 = vpop.permute.xlu0 %903
        %905 = vrot.lane.b32.xlu0 %v660, 126
        %v906 = vpop.permute.xlu0 %905
        %907 = vrot.lane.b32.xlu0 %v661, 126
        %v908 = vpop.permute.xlu0 %907
        %909 = vrot.lane.b32.xlu0 %v662, 126
        %v910 = vpop.permute.xlu0 %909
        %911 = vrot.lane.b32.xlu0 %v663, 126
        %v912 = vpop.permute.xlu0 %911
        %913 = vrot.lane.b32.xlu0 %v664, 126
        %v914 = vpop.permute.xlu0 %913
        %915 = vrot.lane.b32.xlu0 %v665, 126
        %v916 = vpop.permute.xlu0 %915
        %917 = vrot.lane.b32.xlu0 %v666, 126
        %v918 = vpop.permute.xlu0 %917
        %919 = vrot.lane.b32.xlu0 %v667, 126
        %v920 = vpop.permute.xlu0 %919
        %vm921 = vcmask 1031168
        %v922 = vsel %vm921, %v874, %v876
        %v923 = vsel %vm921, %v876, %v878
        %v924 = vsel %vm921, %v880, %v882
        %v925 = vsel %vm921, %v882, %v884
        %v926 = vsel %vm921, %v886, %v888
        %v927 = vsel %vm921, %v888, %v890
        %v928 = vsel %vm921, %v892, %v894
        %v929 = vsel %vm921, %v894, %v896
        %v930 = vsel %vm921, %v898, %v900
        %v931 = vsel %vm921, %v900, %v902
        %v932 = vsel %vm921, %v904, %v906
        %v933 = vsel %vm921, %v906, %v908
        %v934 = vsel %vm921, %v910, %v912
        %v935 = vsel %vm921, %v912, %v914
        %v936 = vsel %vm921, %v916, %v918
        %v937 = vsel %vm921, %v918, %v920
        %v954 = vsel %vm847, %v922, 0.0
        %v955 = vsel %vm848, %v923, 0.0
        %v956 = vsel %vm847, %v924, 0.0
        %v957 = vsel %vm848, %v925, 0.0
        %v958 = vsel %vm847, %v926, 0.0
        %v959 = vsel %vm848, %v927, 0.0
        %v960 = vsel %vm847, %v928, 0.0
        %v961 = vsel %vm848, %v929, 0.0
        %v962 = vsel %vm847, %v930, 0.0
        %v963 = vsel %vm848, %v931, 0.0
        %v964 = vsel %vm847, %v932, 0.0
        %v965 = vsel %vm848, %v933, 0.0
        %v966 = vsel %vm847, %v934, 0.0
        %v967 = vsel %vm848, %v935, 0.0
        %v968 = vsel %vm847, %v936, 0.0
        %v969 = vsel %vm848, %v937, 0.0
        %970 = vset.pattern.permute.xlu0 2
        %971 = vperm.xlu0 %970, %v519
        %v972 = vpop.permute.xlu0 %971
        %974 = vset.pattern.permute.xlu0 2
        %975 = vperm.xlu0 %974, %v520
        %v976 = vpop.permute.xlu0 %975
        %978 = vset.pattern.permute.xlu0 2
        %979 = vperm.xlu0 %978, %v521
        %v980 = vpop.permute.xlu0 %979
        %982 = vset.pattern.permute.xlu0 2
        %983 = vperm.xlu0 %982, %v522
        %v984 = vpop.permute.xlu0 %983
        %986 = vset.pattern.permute.xlu0 2
        %987 = vperm.xlu0 %986, %v523
        %v988 = vpop.permute.xlu0 %987
        %990 = vset.pattern.permute.xlu0 2
        %991 = vperm.xlu0 %990, %v524
        %v992 = vpop.permute.xlu0 %991
        %994 = vset.pattern.permute.xlu0 2
        %995 = vperm.xlu0 %994, %v525
        %v996 = vpop.permute.xlu0 %995
        %998 = vset.pattern.permute.xlu0 2
        %999 = vperm.xlu0 %998, %v526
        %v1000 = vpop.permute.xlu0 %999
        %v1002 = vmul.f32 %v954, %v972
        %v1003 = vmul.f32 %v955, %v972
        %v1004 = vmul.f32 %v956, %v976
        %v1005 = vmul.f32 %v957, %v976
        %v1006 = vmul.f32 %v958, %v980
        %v1007 = vmul.f32 %v959, %v980
        %v1008 = vmul.f32 %v960, %v984
        %v1009 = vmul.f32 %v961, %v984
        %v1010 = vmul.f32 %v962, %v988
        %v1011 = vmul.f32 %v963, %v988
        %v1012 = vmul.f32 %v964, %v992
        %v1013 = vmul.f32 %v965, %v992
        %v1014 = vmul.f32 %v966, %v996
        %v1015 = vmul.f32 %v967, %v996
        %v1016 = vmul.f32 %v968, %v1000
        %v1017 = vmul.f32 %v969, %v1000
        %v1018 = vadd.f32 %v829, %v1002
        %v1019 = vadd.f32 %v830, %v1003
        %v1020 = vadd.f32 %v831, %v1004
        %v1021 = vadd.f32 %v832, %v1005
        %v1022 = vadd.f32 %v833, %v1006
        %v1023 = vadd.f32 %v834, %v1007
        %v1024 = vadd.f32 %v835, %v1008
        %v1025 = vadd.f32 %v836, %v1009
        %v1026 = vadd.f32 %v837, %v1010
        %v1027 = vadd.f32 %v838, %v1011
        %v1028 = vadd.f32 %v839, %v1012
        %v1029 = vadd.f32 %v840, %v1013
        %v1030 = vadd.f32 %v841, %v1014
        %v1031 = vadd.f32 %v842, %v1015
        %v1032 = vadd.f32 %v843, %v1016
        %v1033 = vadd.f32 %v844, %v1017
        %1034 = vrot.lane.b32.xlu0 %v644, 96
        %v1035 = vpop.permute.xlu0 %1034
        %1036 = vrot.lane.b32.xlu0 %v645, 96
        %v1037 = vpop.permute.xlu0 %1036
        %1038 = vrot.lane.b32.xlu0 %v646, 96
        %v1039 = vpop.permute.xlu0 %1038
        %1040 = vrot.lane.b32.xlu0 %v647, 96
        %v1041 = vpop.permute.xlu0 %1040
        %1042 = vrot.lane.b32.xlu0 %v648, 96
        %v1043 = vpop.permute.xlu0 %1042
        %1044 = vrot.lane.b32.xlu0 %v649, 96
        %v1045 = vpop.permute.xlu0 %1044
        %1046 = vrot.lane.b32.xlu0 %v650, 96
        %v1047 = vpop.permute.xlu0 %1046
        %1048 = vrot.lane.b32.xlu0 %v651, 96
        %v1049 = vpop.permute.xlu0 %1048
        %1050 = vrot.lane.b32.xlu0 %v652, 96
        %v1051 = vpop.permute.xlu0 %1050
        %1052 = vrot.lane.b32.xlu0 %v653, 96
        %v1053 = vpop.permute.xlu0 %1052
        %1054 = vrot.lane.b32.xlu0 %v654, 96
        %v1055 = vpop.permute.xlu0 %1054
        %1056 = vrot.lane.b32.xlu0 %v655, 96
        %v1057 = vpop.permute.xlu0 %1056
        %1058 = vrot.lane.b32.xlu0 %v656, 96
        %v1059 = vpop.permute.xlu0 %1058
        %1060 = vrot.lane.b32.xlu0 %v657, 96
        %v1061 = vpop.permute.xlu0 %1060
        %1062 = vrot.lane.b32.xlu0 %v658, 96
        %v1063 = vpop.permute.xlu0 %1062
        %1064 = vrot.lane.b32.xlu0 %v659, 96
        %v1065 = vpop.permute.xlu0 %1064
        %1066 = vrot.lane.b32.xlu0 %v660, 96
        %v1067 = vpop.permute.xlu0 %1066
        %1068 = vrot.lane.b32.xlu0 %v661, 96
        %v1069 = vpop.permute.xlu0 %1068
        %1070 = vrot.lane.b32.xlu0 %v662, 96
        %v1071 = vpop.permute.xlu0 %1070
        %1072 = vrot.lane.b32.xlu0 %v663, 96
        %v1073 = vpop.permute.xlu0 %1072
        %1074 = vrot.lane.b32.xlu0 %v664, 96
        %v1075 = vpop.permute.xlu0 %1074
        %1076 = vrot.lane.b32.xlu0 %v665, 96
        %v1077 = vpop.permute.xlu0 %1076
        %1078 = vrot.lane.b32.xlu0 %v666, 96
        %v1079 = vpop.permute.xlu0 %1078
        %1080 = vrot.lane.b32.xlu0 %v667, 96
        %v1081 = vpop.permute.xlu0 %1080
        %vm1082 = vcmask 785408
        %v1083 = vsel %vm1082, %v1035, %v1037
        %v1084 = vsel %vm1082, %v1037, %v1039
        %v1085 = vsel %vm1082, %v1041, %v1043
        %v1086 = vsel %vm1082, %v1043, %v1045
        %v1087 = vsel %vm1082, %v1047, %v1049
        %v1088 = vsel %vm1082, %v1049, %v1051
        %v1089 = vsel %vm1082, %v1053, %v1055
        %v1090 = vsel %vm1082, %v1055, %v1057
        %v1091 = vsel %vm1082, %v1059, %v1061
        %v1092 = vsel %vm1082, %v1061, %v1063
        %v1093 = vsel %vm1082, %v1065, %v1067
        %v1094 = vsel %vm1082, %v1067, %v1069
        %v1095 = vsel %vm1082, %v1071, %v1073
        %v1096 = vsel %vm1082, %v1073, %v1075
        %v1097 = vsel %vm1082, %v1077, %v1079
        %v1098 = vsel %vm1082, %v1079, %v1081
        %v1115 = vsel %vm554, %v1083, 0.0
        %v1116 = vsel %vm555, %v1084, 0.0
        %v1117 = vsel %vm554, %v1085, 0.0
        %v1118 = vsel %vm555, %v1086, 0.0
        %v1119 = vsel %vm554, %v1087, 0.0
        %v1120 = vsel %vm555, %v1088, 0.0
        %v1121 = vsel %vm554, %v1089, 0.0
        %v1122 = vsel %vm555, %v1090, 0.0
        %v1123 = vsel %vm554, %v1091, 0.0
        %v1124 = vsel %vm555, %v1092, 0.0
        %v1125 = vsel %vm554, %v1093, 0.0
        %v1126 = vsel %vm555, %v1094, 0.0
        %v1127 = vsel %vm554, %v1095, 0.0
        %v1128 = vsel %vm555, %v1096, 0.0
        %v1129 = vsel %vm554, %v1097, 0.0
        %v1130 = vsel %vm555, %v1098, 0.0
        %1131 = vset.pattern.permute.xlu0 3
        %1132 = vperm.xlu0 %1131, %v519
        %v1133 = vpop.permute.xlu0 %1132
        %1135 = vset.pattern.permute.xlu0 3
        %1136 = vperm.xlu0 %1135, %v520
        %v1137 = vpop.permute.xlu0 %1136
        %1139 = vset.pattern.permute.xlu0 3
        %1140 = vperm.xlu0 %1139, %v521
        %v1141 = vpop.permute.xlu0 %1140
        %1143 = vset.pattern.permute.xlu0 3
        %1144 = vperm.xlu0 %1143, %v522
        %v1145 = vpop.permute.xlu0 %1144
        %1147 = vset.pattern.permute.xlu0 3
        %1148 = vperm.xlu0 %1147, %v523
        %v1149 = vpop.permute.xlu0 %1148
        %1151 = vset.pattern.permute.xlu0 3
        %1152 = vperm.xlu0 %1151, %v524
        %v1153 = vpop.permute.xlu0 %1152
        %1155 = vset.pattern.permute.xlu0 3
        %1156 = vperm.xlu0 %1155, %v525
        %v1157 = vpop.permute.xlu0 %1156
        %1159 = vset.pattern.permute.xlu0 3
        %1160 = vperm.xlu0 %1159, %v526
        %v1161 = vpop.permute.xlu0 %1160
        %v1163 = vmul.f32 %v1115, %v1133
        %v1164 = vmul.f32 %v1116, %v1133
        %v1165 = vmul.f32 %v1117, %v1137
        %v1166 = vmul.f32 %v1118, %v1137
        %v1167 = vmul.f32 %v1119, %v1141
        %v1168 = vmul.f32 %v1120, %v1141
        %v1169 = vmul.f32 %v1121, %v1145
        %v1170 = vmul.f32 %v1122, %v1145
        %v1171 = vmul.f32 %v1123, %v1149
        %v1172 = vmul.f32 %v1124, %v1149
        %v1173 = vmul.f32 %v1125, %v1153
        %v1174 = vmul.f32 %v1126, %v1153
        %v1175 = vmul.f32 %v1127, %v1157
        %v1176 = vmul.f32 %v1128, %v1157
        %v1177 = vmul.f32 %v1129, %v1161
        %v1178 = vmul.f32 %v1130, %v1161
        %v1179 = vadd.f32 %v1018, %v1163
        %v1180 = vadd.f32 %v1019, %v1164
        %v1181 = vadd.f32 %v1020, %v1165
        %v1182 = vadd.f32 %v1021, %v1166
        %v1183 = vadd.f32 %v1022, %v1167
        %v1184 = vadd.f32 %v1023, %v1168
        %v1185 = vadd.f32 %v1024, %v1169
        %v1186 = vadd.f32 %v1025, %v1170
        %v1187 = vadd.f32 %v1026, %v1171
        %v1188 = vadd.f32 %v1027, %v1172
        %v1189 = vadd.f32 %v1028, %v1173
        %v1190 = vadd.f32 %v1029, %v1174
        %v1191 = vadd.f32 %v1030, %v1175
        %v1192 = vadd.f32 %v1031, %v1176
        %v1193 = vadd.f32 %v1032, %v1177
        %v1194 = vadd.f32 %v1033, %v1178
        %1195 = vset.pattern.permute.xlu0 4
        %1196 = vperm.xlu0 %1195, %v519
        %v1197 = vpop.permute.xlu0 %1196
        %1199 = vset.pattern.permute.xlu0 4
        %1200 = vperm.xlu0 %1199, %v520
        %v1201 = vpop.permute.xlu0 %1200
        %1203 = vset.pattern.permute.xlu0 4
        %1204 = vperm.xlu0 %1203, %v521
        %v1205 = vpop.permute.xlu0 %1204
        %1207 = vset.pattern.permute.xlu0 4
        %1208 = vperm.xlu0 %1207, %v522
        %v1209 = vpop.permute.xlu0 %1208
        %1211 = vset.pattern.permute.xlu0 4
        %1212 = vperm.xlu0 %1211, %v523
        %v1213 = vpop.permute.xlu0 %1212
        %1215 = vset.pattern.permute.xlu0 4
        %1216 = vperm.xlu0 %1215, %v524
        %v1217 = vpop.permute.xlu0 %1216
        %1219 = vset.pattern.permute.xlu0 4
        %1220 = vperm.xlu0 %1219, %v525
        %v1221 = vpop.permute.xlu0 %1220
        %1223 = vset.pattern.permute.xlu0 4
        %1224 = vperm.xlu0 %1223, %v526
        %v1225 = vpop.permute.xlu0 %1224
        %v1227 = vmul.f32 %v644, %v1197
        %v1228 = vmul.f32 %v645, %v1197
        %v1229 = vmul.f32 %v646, %v1197
        %v1230 = vmul.f32 %v647, %v1201
        %v1231 = vmul.f32 %v648, %v1201
        %v1232 = vmul.f32 %v649, %v1201
        %v1233 = vmul.f32 %v650, %v1205
        %v1234 = vmul.f32 %v651, %v1205
        %v1235 = vmul.f32 %v652, %v1205
        %v1236 = vmul.f32 %v653, %v1209
        %v1237 = vmul.f32 %v654, %v1209
        %v1238 = vmul.f32 %v655, %v1209
        %v1239 = vmul.f32 %v656, %v1213
        %v1240 = vmul.f32 %v657, %v1213
        %v1241 = vmul.f32 %v658, %v1213
        %v1242 = vmul.f32 %v659, %v1217
        %v1243 = vmul.f32 %v660, %v1217
        %v1244 = vmul.f32 %v661, %v1217
        %v1245 = vmul.f32 %v662, %v1221
        %v1246 = vmul.f32 %v663, %v1221
        %v1247 = vmul.f32 %v664, %v1221
        %v1248 = vmul.f32 %v665, %v1225
        %v1249 = vmul.f32 %v666, %v1225
        %v1250 = vmul.f32 %v667, %v1225
        %1275 = vrot.lane.b32.xlu0 %v1227, 95
        %v1276 = vpop.permute.xlu0 %1275
        %1277 = vrot.lane.b32.xlu0 %v1228, 95
        %v1278 = vpop.permute.xlu0 %1277
        %1279 = vrot.lane.b32.xlu0 %v1229, 95
        %v1280 = vpop.permute.xlu0 %1279
        %1281 = vrot.lane.b32.xlu0 %v1230, 95
        %v1282 = vpop.permute.xlu0 %1281
        %1283 = vrot.lane.b32.xlu0 %v1231, 95
        %v1284 = vpop.permute.xlu0 %1283
        %1285 = vrot.lane.b32.xlu0 %v1232, 95
        %v1286 = vpop.permute.xlu0 %1285
        %1287 = vrot.lane.b32.xlu0 %v1233, 95
        %v1288 = vpop.permute.xlu0 %1287
        %1289 = vrot.lane.b32.xlu0 %v1234, 95
        %v1290 = vpop.permute.xlu0 %1289
        %1291 = vrot.lane.b32.xlu0 %v1235, 95
        %v1292 = vpop.permute.xlu0 %1291
        %1293 = vrot.lane.b32.xlu0 %v1236, 95
        %v1294 = vpop.permute.xlu0 %1293
        %1295 = vrot.lane.b32.xlu0 %v1237, 95
        %v1296 = vpop.permute.xlu0 %1295
        %1297 = vrot.lane.b32.xlu0 %v1238, 95
        %v1298 = vpop.permute.xlu0 %1297
        %1299 = vrot.lane.b32.xlu0 %v1239, 95
        %v1300 = vpop.permute.xlu0 %1299
        %1301 = vrot.lane.b32.xlu0 %v1240, 95
        %v1302 = vpop.permute.xlu0 %1301
        %1303 = vrot.lane.b32.xlu0 %v1241, 95
        %v1304 = vpop.permute.xlu0 %1303
        %1305 = vrot.lane.b32.xlu0 %v1242, 95
        %v1306 = vpop.permute.xlu0 %1305
        %1307 = vrot.lane.b32.xlu0 %v1243, 95
        %v1308 = vpop.permute.xlu0 %1307
        %1309 = vrot.lane.b32.xlu0 %v1244, 95
        %v1310 = vpop.permute.xlu0 %1309
        %1311 = vrot.lane.b32.xlu0 %v1245, 95
        %v1312 = vpop.permute.xlu0 %1311
        %1313 = vrot.lane.b32.xlu0 %v1246, 95
        %v1314 = vpop.permute.xlu0 %1313
        %1315 = vrot.lane.b32.xlu0 %v1247, 95
        %v1316 = vpop.permute.xlu0 %1315
        %1317 = vrot.lane.b32.xlu0 %v1248, 95
        %v1318 = vpop.permute.xlu0 %1317
        %1319 = vrot.lane.b32.xlu0 %v1249, 95
        %v1320 = vpop.permute.xlu0 %1319
        %1321 = vrot.lane.b32.xlu0 %v1250, 95
        %v1322 = vpop.permute.xlu0 %1321
        %vm1323 = vcmask 777216
        %v1324 = vsel %vm1323, %v1276, %v1278
        %v1325 = vsel %vm1323, %v1278, %v1280
        %v1326 = vsel %vm1323, %v1282, %v1284
        %v1327 = vsel %vm1323, %v1284, %v1286
        %v1328 = vsel %vm1323, %v1288, %v1290
        %v1329 = vsel %vm1323, %v1290, %v1292
        %v1330 = vsel %vm1323, %v1294, %v1296
        %v1331 = vsel %vm1323, %v1296, %v1298
        %v1332 = vsel %vm1323, %v1300, %v1302
        %v1333 = vsel %vm1323, %v1302, %v1304
        %v1334 = vsel %vm1323, %v1306, %v1308
        %v1335 = vsel %vm1323, %v1308, %v1310
        %v1336 = vsel %vm1323, %v1312, %v1314
        %v1337 = vsel %vm1323, %v1314, %v1316
        %v1338 = vsel %vm1323, %v1318, %v1320
        %v1339 = vsel %vm1323, %v1320, %v1322
        %v1356 = vadd.f32 %v1179, %v1324
        %v1357 = vadd.f32 %v1180, %v1325
        %v1358 = vadd.f32 %v1181, %v1326
        %v1359 = vadd.f32 %v1182, %v1327
        %v1360 = vadd.f32 %v1183, %v1328
        %v1361 = vadd.f32 %v1184, %v1329
        %v1362 = vadd.f32 %v1185, %v1330
        %v1363 = vadd.f32 %v1186, %v1331
        %v1364 = vadd.f32 %v1187, %v1332
        %v1365 = vadd.f32 %v1188, %v1333
        %v1366 = vadd.f32 %v1189, %v1334
        %v1367 = vadd.f32 %v1190, %v1335
        %v1368 = vadd.f32 %v1191, %v1336
        %v1369 = vadd.f32 %v1192, %v1337
        %v1370 = vadd.f32 %v1193, %v1338
        %v1371 = vadd.f32 %v1194, %v1339
        %1372 = vrot.lane.b32.xlu0 %v644, 94
        %v1373 = vpop.permute.xlu0 %1372
        %1374 = vrot.lane.b32.xlu0 %v645, 94
        %v1375 = vpop.permute.xlu0 %1374
        %1376 = vrot.lane.b32.xlu0 %v646, 94
        %v1377 = vpop.permute.xlu0 %1376
        %1378 = vrot.lane.b32.xlu0 %v647, 94
        %v1379 = vpop.permute.xlu0 %1378
        %1380 = vrot.lane.b32.xlu0 %v648, 94
        %v1381 = vpop.permute.xlu0 %1380
        %1382 = vrot.lane.b32.xlu0 %v649, 94
        %v1383 = vpop.permute.xlu0 %1382
        %1384 = vrot.lane.b32.xlu0 %v650, 94
        %v1385 = vpop.permute.xlu0 %1384
        %1386 = vrot.lane.b32.xlu0 %v651, 94
        %v1387 = vpop.permute.xlu0 %1386
        %1388 = vrot.lane.b32.xlu0 %v652, 94
        %v1389 = vpop.permute.xlu0 %1388
        %1390 = vrot.lane.b32.xlu0 %v653, 94
        %v1391 = vpop.permute.xlu0 %1390
        %1392 = vrot.lane.b32.xlu0 %v654, 94
        %v1393 = vpop.permute.xlu0 %1392
        %1394 = vrot.lane.b32.xlu0 %v655, 94
        %v1395 = vpop.permute.xlu0 %1394
        %1396 = vrot.lane.b32.xlu0 %v656, 94
        %v1397 = vpop.permute.xlu0 %1396
        %1398 = vrot.lane.b32.xlu0 %v657, 94
        %v1399 = vpop.permute.xlu0 %1398
        %1400 = vrot.lane.b32.xlu0 %v658, 94
        %v1401 = vpop.permute.xlu0 %1400
        %1402 = vrot.lane.b32.xlu0 %v659, 94
        %v1403 = vpop.permute.xlu0 %1402
        %1404 = vrot.lane.b32.xlu0 %v660, 94
        %v1405 = vpop.permute.xlu0 %1404
        %1406 = vrot.lane.b32.xlu0 %v661, 94
        %v1407 = vpop.permute.xlu0 %1406
        %1408 = vrot.lane.b32.xlu0 %v662, 94
        %v1409 = vpop.permute.xlu0 %1408
        %1410 = vrot.lane.b32.xlu0 %v663, 94
        %v1411 = vpop.permute.xlu0 %1410
        %1412 = vrot.lane.b32.xlu0 %v664, 94
        %v1413 = vpop.permute.xlu0 %1412
        %1414 = vrot.lane.b32.xlu0 %v665, 94
        %v1415 = vpop.permute.xlu0 %1414
        %1416 = vrot.lane.b32.xlu0 %v666, 94
        %v1417 = vpop.permute.xlu0 %1416
        %1418 = vrot.lane.b32.xlu0 %v667, 94
        %v1419 = vpop.permute.xlu0 %1418
        %vm1420 = vcmask 769024
        %v1421 = vsel %vm1420, %v1373, %v1375
        %v1422 = vsel %vm1420, %v1375, %v1377
        %v1423 = vsel %vm1420, %v1379, %v1381
        %v1424 = vsel %vm1420, %v1381, %v1383
        %v1425 = vsel %vm1420, %v1385, %v1387
        %v1426 = vsel %vm1420, %v1387, %v1389
        %v1427 = vsel %vm1420, %v1391, %v1393
        %v1428 = vsel %vm1420, %v1393, %v1395
        %v1429 = vsel %vm1420, %v1397, %v1399
        %v1430 = vsel %vm1420, %v1399, %v1401
        %v1431 = vsel %vm1420, %v1403, %v1405
        %v1432 = vsel %vm1420, %v1405, %v1407
        %v1433 = vsel %vm1420, %v1409, %v1411
        %v1434 = vsel %vm1420, %v1411, %v1413
        %v1435 = vsel %vm1420, %v1415, %v1417
        %v1436 = vsel %vm1420, %v1417, %v1419
        %v1453 = vsel %vm847, %v1421, 0.0
        %v1454 = vsel %vm848, %v1422, 0.0
        %v1455 = vsel %vm847, %v1423, 0.0
        %v1456 = vsel %vm848, %v1424, 0.0
        %v1457 = vsel %vm847, %v1425, 0.0
        %v1458 = vsel %vm848, %v1426, 0.0
        %v1459 = vsel %vm847, %v1427, 0.0
        %v1460 = vsel %vm848, %v1428, 0.0
        %v1461 = vsel %vm847, %v1429, 0.0
        %v1462 = vsel %vm848, %v1430, 0.0
        %v1463 = vsel %vm847, %v1431, 0.0
        %v1464 = vsel %vm848, %v1432, 0.0
        %v1465 = vsel %vm847, %v1433, 0.0
        %v1466 = vsel %vm848, %v1434, 0.0
        %v1467 = vsel %vm847, %v1435, 0.0
        %v1468 = vsel %vm848, %v1436, 0.0
        %1469 = vset.pattern.permute.xlu0 5
        %1470 = vperm.xlu0 %1469, %v519
        %v1471 = vpop.permute.xlu0 %1470
        %1473 = vset.pattern.permute.xlu0 5
        %1474 = vperm.xlu0 %1473, %v520
        %v1475 = vpop.permute.xlu0 %1474
        %1477 = vset.pattern.permute.xlu0 5
        %1478 = vperm.xlu0 %1477, %v521
        %v1479 = vpop.permute.xlu0 %1478
        %1481 = vset.pattern.permute.xlu0 5
        %1482 = vperm.xlu0 %1481, %v522
        %v1483 = vpop.permute.xlu0 %1482
        %1485 = vset.pattern.permute.xlu0 5
        %1486 = vperm.xlu0 %1485, %v523
        %v1487 = vpop.permute.xlu0 %1486
        %1489 = vset.pattern.permute.xlu0 5
        %1490 = vperm.xlu0 %1489, %v524
        %v1491 = vpop.permute.xlu0 %1490
        %1493 = vset.pattern.permute.xlu0 5
        %1494 = vperm.xlu0 %1493, %v525
        %v1495 = vpop.permute.xlu0 %1494
        %1497 = vset.pattern.permute.xlu0 5
        %1498 = vperm.xlu0 %1497, %v526
        %v1499 = vpop.permute.xlu0 %1498
        %v1501 = vmul.f32 %v1453, %v1471
        %v1502 = vmul.f32 %v1454, %v1471
        %v1503 = vmul.f32 %v1455, %v1475
        %v1504 = vmul.f32 %v1456, %v1475
        %v1505 = vmul.f32 %v1457, %v1479
        %v1506 = vmul.f32 %v1458, %v1479
        %v1507 = vmul.f32 %v1459, %v1483
        %v1508 = vmul.f32 %v1460, %v1483
        %v1509 = vmul.f32 %v1461, %v1487
        %v1510 = vmul.f32 %v1462, %v1487
        %v1511 = vmul.f32 %v1463, %v1491
        %v1512 = vmul.f32 %v1464, %v1491
        %v1513 = vmul.f32 %v1465, %v1495
        %v1514 = vmul.f32 %v1466, %v1495
        %v1515 = vmul.f32 %v1467, %v1499
        %v1516 = vmul.f32 %v1468, %v1499
        %v1517 = vadd.f32 %v1356, %v1501
        %v1518 = vadd.f32 %v1357, %v1502
        %v1519 = vadd.f32 %v1358, %v1503
        %v1520 = vadd.f32 %v1359, %v1504
        %v1521 = vadd.f32 %v1360, %v1505
        %v1522 = vadd.f32 %v1361, %v1506
        %v1523 = vadd.f32 %v1362, %v1507
        %v1524 = vadd.f32 %v1363, %v1508
        %v1525 = vadd.f32 %v1364, %v1509
        %v1526 = vadd.f32 %v1365, %v1510
        %v1527 = vadd.f32 %v1366, %v1511
        %v1528 = vadd.f32 %v1367, %v1512
        %v1529 = vadd.f32 %v1368, %v1513
        %v1530 = vadd.f32 %v1369, %v1514
        %v1531 = vadd.f32 %v1370, %v1515
        %v1532 = vadd.f32 %v1371, %v1516
        %1533 = vrot.lane.b32.xlu0 %v644, 64
        %v1534 = vpop.permute.xlu0 %1533
        %1535 = vrot.lane.b32.xlu0 %v645, 64
        %v1536 = vpop.permute.xlu0 %1535
        %1537 = vrot.lane.b32.xlu0 %v646, 64
        %v1538 = vpop.permute.xlu0 %1537
        %1539 = vrot.lane.b32.xlu0 %v647, 64
        %v1540 = vpop.permute.xlu0 %1539
        %1541 = vrot.lane.b32.xlu0 %v648, 64
        %v1542 = vpop.permute.xlu0 %1541
        %1543 = vrot.lane.b32.xlu0 %v649, 64
        %v1544 = vpop.permute.xlu0 %1543
        %1545 = vrot.lane.b32.xlu0 %v650, 64
        %v1546 = vpop.permute.xlu0 %1545
        %1547 = vrot.lane.b32.xlu0 %v651, 64
        %v1548 = vpop.permute.xlu0 %1547
        %1549 = vrot.lane.b32.xlu0 %v652, 64
        %v1550 = vpop.permute.xlu0 %1549
        %1551 = vrot.lane.b32.xlu0 %v653, 64
        %v1552 = vpop.permute.xlu0 %1551
        %1553 = vrot.lane.b32.xlu0 %v654, 64
        %v1554 = vpop.permute.xlu0 %1553
        %1555 = vrot.lane.b32.xlu0 %v655, 64
        %v1556 = vpop.permute.xlu0 %1555
        %1557 = vrot.lane.b32.xlu0 %v656, 64
        %v1558 = vpop.permute.xlu0 %1557
        %1559 = vrot.lane.b32.xlu0 %v657, 64
        %v1560 = vpop.permute.xlu0 %1559
        %1561 = vrot.lane.b32.xlu0 %v658, 64
        %v1562 = vpop.permute.xlu0 %1561
        %1563 = vrot.lane.b32.xlu0 %v659, 64
        %v1564 = vpop.permute.xlu0 %1563
        %1565 = vrot.lane.b32.xlu0 %v660, 64
        %v1566 = vpop.permute.xlu0 %1565
        %1567 = vrot.lane.b32.xlu0 %v661, 64
        %v1568 = vpop.permute.xlu0 %1567
        %1569 = vrot.lane.b32.xlu0 %v662, 64
        %v1570 = vpop.permute.xlu0 %1569
        %1571 = vrot.lane.b32.xlu0 %v663, 64
        %v1572 = vpop.permute.xlu0 %1571
        %1573 = vrot.lane.b32.xlu0 %v664, 64
        %v1574 = vpop.permute.xlu0 %1573
        %1575 = vrot.lane.b32.xlu0 %v665, 64
        %v1576 = vpop.permute.xlu0 %1575
        %1577 = vrot.lane.b32.xlu0 %v666, 64
        %v1578 = vpop.permute.xlu0 %1577
        %1579 = vrot.lane.b32.xlu0 %v667, 64
        %v1580 = vpop.permute.xlu0 %1579
        %vm1581 = vcmask 523264
        %v1582 = vsel %vm1581, %v1534, %v1536
        %v1583 = vsel %vm1581, %v1536, %v1538
        %v1584 = vsel %vm1581, %v1540, %v1542
        %v1585 = vsel %vm1581, %v1542, %v1544
        %v1586 = vsel %vm1581, %v1546, %v1548
        %v1587 = vsel %vm1581, %v1548, %v1550
        %v1588 = vsel %vm1581, %v1552, %v1554
        %v1589 = vsel %vm1581, %v1554, %v1556
        %v1590 = vsel %vm1581, %v1558, %v1560
        %v1591 = vsel %vm1581, %v1560, %v1562
        %v1592 = vsel %vm1581, %v1564, %v1566
        %v1593 = vsel %vm1581, %v1566, %v1568
        %v1594 = vsel %vm1581, %v1570, %v1572
        %v1595 = vsel %vm1581, %v1572, %v1574
        %v1596 = vsel %vm1581, %v1576, %v1578
        %v1597 = vsel %vm1581, %v1578, %v1580
        %v1614 = vsel %vm554, %v1582, 0.0
        %v1615 = vsel %vm555, %v1583, 0.0
        %v1616 = vsel %vm554, %v1584, 0.0
        %v1617 = vsel %vm555, %v1585, 0.0
        %v1618 = vsel %vm554, %v1586, 0.0
        %v1619 = vsel %vm555, %v1587, 0.0
        %v1620 = vsel %vm554, %v1588, 0.0
        %v1621 = vsel %vm555, %v1589, 0.0
        %v1622 = vsel %vm554, %v1590, 0.0
        %v1623 = vsel %vm555, %v1591, 0.0
        %v1624 = vsel %vm554, %v1592, 0.0
        %v1625 = vsel %vm555, %v1593, 0.0
        %v1626 = vsel %vm554, %v1594, 0.0
        %v1627 = vsel %vm555, %v1595, 0.0
        %v1628 = vsel %vm554, %v1596, 0.0
        %v1629 = vsel %vm555, %v1597, 0.0
        %1630 = vset.pattern.permute.xlu0 6
        %1631 = vperm.xlu0 %1630, %v519
        %v1632 = vpop.permute.xlu0 %1631
        %1634 = vset.pattern.permute.xlu0 6
        %1635 = vperm.xlu0 %1634, %v520
        %v1636 = vpop.permute.xlu0 %1635
        %1638 = vset.pattern.permute.xlu0 6
        %1639 = vperm.xlu0 %1638, %v521
        %v1640 = vpop.permute.xlu0 %1639
        %1642 = vset.pattern.permute.xlu0 6
        %1643 = vperm.xlu0 %1642, %v522
        %v1644 = vpop.permute.xlu0 %1643
        %1646 = vset.pattern.permute.xlu0 6
        %1647 = vperm.xlu0 %1646, %v523
        %v1648 = vpop.permute.xlu0 %1647
        %1650 = vset.pattern.permute.xlu0 6
        %1651 = vperm.xlu0 %1650, %v524
        %v1652 = vpop.permute.xlu0 %1651
        %1654 = vset.pattern.permute.xlu0 6
        %1655 = vperm.xlu0 %1654, %v525
        %v1656 = vpop.permute.xlu0 %1655
        %1658 = vset.pattern.permute.xlu0 6
        %1659 = vperm.xlu0 %1658, %v526
        %v1660 = vpop.permute.xlu0 %1659
        %v1662 = vmul.f32 %v1614, %v1632
        %v1663 = vmul.f32 %v1615, %v1632
        %v1664 = vmul.f32 %v1616, %v1636
        %v1665 = vmul.f32 %v1617, %v1636
        %v1666 = vmul.f32 %v1618, %v1640
        %v1667 = vmul.f32 %v1619, %v1640
        %v1668 = vmul.f32 %v1620, %v1644
        %v1669 = vmul.f32 %v1621, %v1644
        %v1670 = vmul.f32 %v1622, %v1648
        %v1671 = vmul.f32 %v1623, %v1648
        %v1672 = vmul.f32 %v1624, %v1652
        %v1673 = vmul.f32 %v1625, %v1652
        %v1674 = vmul.f32 %v1626, %v1656
        %v1675 = vmul.f32 %v1627, %v1656
        %v1676 = vmul.f32 %v1628, %v1660
        %v1677 = vmul.f32 %v1629, %v1660
        %v1678 = vadd.f32 %v1517, %v1662
        %v1679 = vadd.f32 %v1518, %v1663
        %v1680 = vadd.f32 %v1519, %v1664
        %v1681 = vadd.f32 %v1520, %v1665
        %v1682 = vadd.f32 %v1521, %v1666
        %v1683 = vadd.f32 %v1522, %v1667
        %v1684 = vadd.f32 %v1523, %v1668
        %v1685 = vadd.f32 %v1524, %v1669
        %v1686 = vadd.f32 %v1525, %v1670
        %v1687 = vadd.f32 %v1526, %v1671
        %v1688 = vadd.f32 %v1527, %v1672
        %v1689 = vadd.f32 %v1528, %v1673
        %v1690 = vadd.f32 %v1529, %v1674
        %v1691 = vadd.f32 %v1530, %v1675
        %v1692 = vadd.f32 %v1531, %v1676
        %v1693 = vadd.f32 %v1532, %v1677
        %1694 = vset.pattern.permute.xlu0 7
        %1695 = vperm.xlu0 %1694, %v519
        %v1696 = vpop.permute.xlu0 %1695
        %1698 = vset.pattern.permute.xlu0 7
        %1699 = vperm.xlu0 %1698, %v520
        %v1700 = vpop.permute.xlu0 %1699
        %1702 = vset.pattern.permute.xlu0 7
        %1703 = vperm.xlu0 %1702, %v521
        %v1704 = vpop.permute.xlu0 %1703
        %1706 = vset.pattern.permute.xlu0 7
        %1707 = vperm.xlu0 %1706, %v522
        %v1708 = vpop.permute.xlu0 %1707
        %1710 = vset.pattern.permute.xlu0 7
        %1711 = vperm.xlu0 %1710, %v523
        %v1712 = vpop.permute.xlu0 %1711
        %1714 = vset.pattern.permute.xlu0 7
        %1715 = vperm.xlu0 %1714, %v524
        %v1716 = vpop.permute.xlu0 %1715
        %1718 = vset.pattern.permute.xlu0 7
        %1719 = vperm.xlu0 %1718, %v525
        %v1720 = vpop.permute.xlu0 %1719
        %1722 = vset.pattern.permute.xlu0 7
        %1723 = vperm.xlu0 %1722, %v526
        %v1724 = vpop.permute.xlu0 %1723
        %v1726 = vmul.f32 %v644, %v1696
        %v1727 = vmul.f32 %v645, %v1696
        %v1728 = vmul.f32 %v646, %v1696
        %v1729 = vmul.f32 %v647, %v1700
        %v1730 = vmul.f32 %v648, %v1700
        %v1731 = vmul.f32 %v649, %v1700
        %v1732 = vmul.f32 %v650, %v1704
        %v1733 = vmul.f32 %v651, %v1704
        %v1734 = vmul.f32 %v652, %v1704
        %v1735 = vmul.f32 %v653, %v1708
        %v1736 = vmul.f32 %v654, %v1708
        %v1737 = vmul.f32 %v655, %v1708
        %v1738 = vmul.f32 %v656, %v1712
        %v1739 = vmul.f32 %v657, %v1712
        %v1740 = vmul.f32 %v658, %v1712
        %v1741 = vmul.f32 %v659, %v1716
        %v1742 = vmul.f32 %v660, %v1716
        %v1743 = vmul.f32 %v661, %v1716
        %v1744 = vmul.f32 %v662, %v1720
        %v1745 = vmul.f32 %v663, %v1720
        %v1746 = vmul.f32 %v664, %v1720
        %v1747 = vmul.f32 %v665, %v1724
        %v1748 = vmul.f32 %v666, %v1724
        %v1749 = vmul.f32 %v667, %v1724
        %1774 = vrot.lane.b32.xlu0 %v1726, 63
        %v1775 = vpop.permute.xlu0 %1774
        %1776 = vrot.lane.b32.xlu0 %v1727, 63
        %v1777 = vpop.permute.xlu0 %1776
        %1778 = vrot.lane.b32.xlu0 %v1728, 63
        %v1779 = vpop.permute.xlu0 %1778
        %1780 = vrot.lane.b32.xlu0 %v1729, 63
        %v1781 = vpop.permute.xlu0 %1780
        %1782 = vrot.lane.b32.xlu0 %v1730, 63
        %v1783 = vpop.permute.xlu0 %1782
        %1784 = vrot.lane.b32.xlu0 %v1731, 63
        %v1785 = vpop.permute.xlu0 %1784
        %1786 = vrot.lane.b32.xlu0 %v1732, 63
        %v1787 = vpop.permute.xlu0 %1786
        %1788 = vrot.lane.b32.xlu0 %v1733, 63
        %v1789 = vpop.permute.xlu0 %1788
        %1790 = vrot.lane.b32.xlu0 %v1734, 63
        %v1791 = vpop.permute.xlu0 %1790
        %1792 = vrot.lane.b32.xlu0 %v1735, 63
        %v1793 = vpop.permute.xlu0 %1792
        %1794 = vrot.lane.b32.xlu0 %v1736, 63
        %v1795 = vpop.permute.xlu0 %1794
        %1796 = vrot.lane.b32.xlu0 %v1737, 63
        %v1797 = vpop.permute.xlu0 %1796
        %1798 = vrot.lane.b32.xlu0 %v1738, 63
        %v1799 = vpop.permute.xlu0 %1798
        %1800 = vrot.lane.b32.xlu0 %v1739, 63
        %v1801 = vpop.permute.xlu0 %1800
        %1802 = vrot.lane.b32.xlu0 %v1740, 63
        %v1803 = vpop.permute.xlu0 %1802
        %1804 = vrot.lane.b32.xlu0 %v1741, 63
        %v1805 = vpop.permute.xlu0 %1804
        %1806 = vrot.lane.b32.xlu0 %v1742, 63
        %v1807 = vpop.permute.xlu0 %1806
        %1808 = vrot.lane.b32.xlu0 %v1743, 63
        %v1809 = vpop.permute.xlu0 %1808
        %1810 = vrot.lane.b32.xlu0 %v1744, 63
        %v1811 = vpop.permute.xlu0 %1810
        %1812 = vrot.lane.b32.xlu0 %v1745, 63
        %v1813 = vpop.permute.xlu0 %1812
        %1814 = vrot.lane.b32.xlu0 %v1746, 63
        %v1815 = vpop.permute.xlu0 %1814
        %1816 = vrot.lane.b32.xlu0 %v1747, 63
        %v1817 = vpop.permute.xlu0 %1816
        %1818 = vrot.lane.b32.xlu0 %v1748, 63
        %v1819 = vpop.permute.xlu0 %1818
        %1820 = vrot.lane.b32.xlu0 %v1749, 63
        %v1821 = vpop.permute.xlu0 %1820
        %vm1822 = vcmask 515072
        %v1823 = vsel %vm1822, %v1775, %v1777
        %v1824 = vsel %vm1822, %v1777, %v1779
        %v1825 = vsel %vm1822, %v1781, %v1783
        %v1826 = vsel %vm1822, %v1783, %v1785
        %v1827 = vsel %vm1822, %v1787, %v1789
        %v1828 = vsel %vm1822, %v1789, %v1791
        %v1829 = vsel %vm1822, %v1793, %v1795
        %v1830 = vsel %vm1822, %v1795, %v1797
        %v1831 = vsel %vm1822, %v1799, %v1801
        %v1832 = vsel %vm1822, %v1801, %v1803
        %v1833 = vsel %vm1822, %v1805, %v1807
        %v1834 = vsel %vm1822, %v1807, %v1809
        %v1835 = vsel %vm1822, %v1811, %v1813
        %v1836 = vsel %vm1822, %v1813, %v1815
        %v1837 = vsel %vm1822, %v1817, %v1819
        %v1838 = vsel %vm1822, %v1819, %v1821
        %v1855 = vadd.f32 %v1678, %v1823
        %v1856 = vadd.f32 %v1679, %v1824
        %v1857 = vadd.f32 %v1680, %v1825
        %v1858 = vadd.f32 %v1681, %v1826
        %v1859 = vadd.f32 %v1682, %v1827
        %v1860 = vadd.f32 %v1683, %v1828
        %v1861 = vadd.f32 %v1684, %v1829
        %v1862 = vadd.f32 %v1685, %v1830
        %v1863 = vadd.f32 %v1686, %v1831
        %v1864 = vadd.f32 %v1687, %v1832
        %v1865 = vadd.f32 %v1688, %v1833
        %v1866 = vadd.f32 %v1689, %v1834
        %v1867 = vadd.f32 %v1690, %v1835
        %v1868 = vadd.f32 %v1691, %v1836
        %v1869 = vadd.f32 %v1692, %v1837
        %v1870 = vadd.f32 %v1693, %v1838
        %1871 = vrot.lane.b32.xlu0 %v644, 62
        %v1872 = vpop.permute.xlu0 %1871
        %1873 = vrot.lane.b32.xlu0 %v645, 62
        %v1874 = vpop.permute.xlu0 %1873
        %1875 = vrot.lane.b32.xlu0 %v646, 62
        %v1876 = vpop.permute.xlu0 %1875
        %1877 = vrot.lane.b32.xlu0 %v647, 62
        %v1878 = vpop.permute.xlu0 %1877
        %1879 = vrot.lane.b32.xlu0 %v648, 62
        %v1880 = vpop.permute.xlu0 %1879
        %1881 = vrot.lane.b32.xlu0 %v649, 62
        %v1882 = vpop.permute.xlu0 %1881
        %1883 = vrot.lane.b32.xlu0 %v650, 62
        %v1884 = vpop.permute.xlu0 %1883
        %1885 = vrot.lane.b32.xlu0 %v651, 62
        %v1886 = vpop.permute.xlu0 %1885
        %1887 = vrot.lane.b32.xlu0 %v652, 62
        %v1888 = vpop.permute.xlu0 %1887
        %1889 = vrot.lane.b32.xlu0 %v653, 62
        %v1890 = vpop.permute.xlu0 %1889
        %1891 = vrot.lane.b32.xlu0 %v654, 62
        %v1892 = vpop.permute.xlu0 %1891
        %1893 = vrot.lane.b32.xlu0 %v655, 62
        %v1894 = vpop.permute.xlu0 %1893
        %1895 = vrot.lane.b32.xlu0 %v656, 62
        %v1896 = vpop.permute.xlu0 %1895
        %1897 = vrot.lane.b32.xlu0 %v657, 62
        %v1898 = vpop.permute.xlu0 %1897
        %1899 = vrot.lane.b32.xlu0 %v658, 62
        %v1900 = vpop.permute.xlu0 %1899
        %1901 = vrot.lane.b32.xlu0 %v659, 62
        %v1902 = vpop.permute.xlu0 %1901
        %1903 = vrot.lane.b32.xlu0 %v660, 62
        %v1904 = vpop.permute.xlu0 %1903
        %1905 = vrot.lane.b32.xlu0 %v661, 62
        %v1906 = vpop.permute.xlu0 %1905
        %1907 = vrot.lane.b32.xlu0 %v662, 62
        %v1908 = vpop.permute.xlu0 %1907
        %1909 = vrot.lane.b32.xlu0 %v663, 62
        %v1910 = vpop.permute.xlu0 %1909
        %1911 = vrot.lane.b32.xlu0 %v664, 62
        %v1912 = vpop.permute.xlu0 %1911
        %1913 = vrot.lane.b32.xlu0 %v665, 62
        %v1914 = vpop.permute.xlu0 %1913
        %1915 = vrot.lane.b32.xlu0 %v666, 62
        %v1916 = vpop.permute.xlu0 %1915
        %1917 = vrot.lane.b32.xlu0 %v667, 62
        %v1918 = vpop.permute.xlu0 %1917
        %vm1919 = vcmask 506880
        %v1920 = vsel %vm1919, %v1872, %v1874
        %v1921 = vsel %vm1919, %v1874, %v1876
        %v1922 = vsel %vm1919, %v1878, %v1880
        %v1923 = vsel %vm1919, %v1880, %v1882
        %v1924 = vsel %vm1919, %v1884, %v1886
        %v1925 = vsel %vm1919, %v1886, %v1888
        %v1926 = vsel %vm1919, %v1890, %v1892
        %v1927 = vsel %vm1919, %v1892, %v1894
        %v1928 = vsel %vm1919, %v1896, %v1898
        %v1929 = vsel %vm1919, %v1898, %v1900
        %v1930 = vsel %vm1919, %v1902, %v1904
        %v1931 = vsel %vm1919, %v1904, %v1906
        %v1932 = vsel %vm1919, %v1908, %v1910
        %v1933 = vsel %vm1919, %v1910, %v1912
        %v1934 = vsel %vm1919, %v1914, %v1916
        %v1935 = vsel %vm1919, %v1916, %v1918
        %v1952 = vsel %vm847, %v1920, 0.0
        %v1953 = vsel %vm848, %v1921, 0.0
        %v1954 = vsel %vm847, %v1922, 0.0
        %v1955 = vsel %vm848, %v1923, 0.0
        %v1956 = vsel %vm847, %v1924, 0.0
        %v1957 = vsel %vm848, %v1925, 0.0
        %v1958 = vsel %vm847, %v1926, 0.0
        %v1959 = vsel %vm848, %v1927, 0.0
        %v1960 = vsel %vm847, %v1928, 0.0
        %v1961 = vsel %vm848, %v1929, 0.0
        %v1962 = vsel %vm847, %v1930, 0.0
        %v1963 = vsel %vm848, %v1931, 0.0
        %v1964 = vsel %vm847, %v1932, 0.0
        %v1965 = vsel %vm848, %v1933, 0.0
        %v1966 = vsel %vm847, %v1934, 0.0
        %v1967 = vsel %vm848, %v1935, 0.0
        %1968 = vset.pattern.permute.xlu0 8
        %1969 = vperm.xlu0 %1968, %v519
        %v1970 = vpop.permute.xlu0 %1969
        %1972 = vset.pattern.permute.xlu0 8
        %1973 = vperm.xlu0 %1972, %v520
        %v1974 = vpop.permute.xlu0 %1973
        %1976 = vset.pattern.permute.xlu0 8
        %1977 = vperm.xlu0 %1976, %v521
        %v1978 = vpop.permute.xlu0 %1977
        %1980 = vset.pattern.permute.xlu0 8
        %1981 = vperm.xlu0 %1980, %v522
        %v1982 = vpop.permute.xlu0 %1981
        %1984 = vset.pattern.permute.xlu0 8
        %1985 = vperm.xlu0 %1984, %v523
        %v1986 = vpop.permute.xlu0 %1985
        %1988 = vset.pattern.permute.xlu0 8
        %1989 = vperm.xlu0 %1988, %v524
        %v1990 = vpop.permute.xlu0 %1989
        %1992 = vset.pattern.permute.xlu0 8
        %1993 = vperm.xlu0 %1992, %v525
        %v1994 = vpop.permute.xlu0 %1993
        %1996 = vset.pattern.permute.xlu0 8
        %1997 = vperm.xlu0 %1996, %v526
        %v1998 = vpop.permute.xlu0 %1997
        %v2000 = vmul.f32 %v1952, %v1970
        %v2001 = vmul.f32 %v1953, %v1970
        %v2002 = vmul.f32 %v1954, %v1974
        %v2003 = vmul.f32 %v1955, %v1974
        %v2004 = vmul.f32 %v1956, %v1978
        %v2005 = vmul.f32 %v1957, %v1978
        %v2006 = vmul.f32 %v1958, %v1982
        %v2007 = vmul.f32 %v1959, %v1982
        %v2008 = vmul.f32 %v1960, %v1986
        %v2009 = vmul.f32 %v1961, %v1986
        %v2010 = vmul.f32 %v1962, %v1990
        %v2011 = vmul.f32 %v1963, %v1990
        %v2012 = vmul.f32 %v1964, %v1994
        %v2013 = vmul.f32 %v1965, %v1994
        %v2014 = vmul.f32 %v1966, %v1998
        %v2015 = vmul.f32 %v1967, %v1998
        %v2016 = vadd.f32 %v1855, %v2000
        %v2017 = vadd.f32 %v1856, %v2001
        %v2018 = vadd.f32 %v1857, %v2002
        %v2019 = vadd.f32 %v1858, %v2003
        %v2020 = vadd.f32 %v1859, %v2004
        %v2021 = vadd.f32 %v1860, %v2005
        %v2022 = vadd.f32 %v1861, %v2006
        %v2023 = vadd.f32 %v1862, %v2007
        %v2024 = vadd.f32 %v1863, %v2008
        %v2025 = vadd.f32 %v1864, %v2009
        %v2026 = vadd.f32 %v1865, %v2010
        %v2027 = vadd.f32 %v1866, %v2011
        %v2028 = vadd.f32 %v1867, %v2012
        %v2029 = vadd.f32 %v1868, %v2013
        %v2030 = vadd.f32 %v1869, %v2014
        %v2031 = vadd.f32 %v1870, %v2015
        %v2032 = vadd.f32 %v2016, %v2018
        %v2033 = vadd.f32 %v2032, %v2020
        %v2034 = vadd.f32 %v2033, %v2022
        %v2035 = vadd.f32 %v2034, %v2024
        %v2036 = vadd.f32 %v2035, %v2026
        %v2037 = vadd.f32 %v2036, %v2028
        %v2038 = vadd.f32 %v2037, %v2030
        %v2039 = vrot.slane %v2038, 4
        %v2040 = vadd.f32 %v2038, %v2039
        %v2041 = vrot.slane %v2040, 2
        %v2042 = vadd.f32 %v2040, %v2041
        %v2043 = vrot.slane %v2042, 1
        %v2044 = vadd.f32 %v2042, %v2043
        %v2045 = vadd.f32 %v2017, %v2019
        %v2046 = vadd.f32 %v2045, %v2021
        %v2047 = vadd.f32 %v2046, %v2023
        %v2048 = vadd.f32 %v2047, %v2025
        %v2049 = vadd.f32 %v2048, %v2027
        %v2050 = vadd.f32 %v2049, %v2029
        %v2051 = vadd.f32 %v2050, %v2031
        %v2052 = vrot.slane %v2051, 4
        %v2053 = vadd.f32 %v2051, %v2052
        %v2054 = vrot.slane %v2053, 2
        %v2055 = vadd.f32 %v2053, %v2054
        %v2056 = vrot.slane %v2055, 1
        %v2057 = vadd.f32 %v2055, %v2056
        %v2058 = vrcp.pop 64.0
        %v2059 = vmul.f32 %v2044, %v2058
        %v2060 = vmul.f32 %v2057, %v2058
        %v2061 = vsub.f32 %v2016, %v2059
        %v2062 = vsub.f32 %v2017, %v2060
        %v2063 = vsub.f32 %v2018, %v2059
        %v2064 = vsub.f32 %v2019, %v2060
        %v2065 = vsub.f32 %v2020, %v2059
        %v2066 = vsub.f32 %v2021, %v2060
        %v2067 = vsub.f32 %v2022, %v2059
        %v2068 = vsub.f32 %v2023, %v2060
        %v2069 = vsub.f32 %v2024, %v2059
        %v2070 = vsub.f32 %v2025, %v2060
        %v2071 = vsub.f32 %v2026, %v2059
        %v2072 = vsub.f32 %v2027, %v2060
        %v2073 = vsub.f32 %v2028, %v2059
        %v2074 = vsub.f32 %v2029, %v2060
        %v2075 = vsub.f32 %v2030, %v2059
        %v2076 = vsub.f32 %v2031, %v2060
        %v2077 = vmul.f32 %v2061, %v2061
        %v2078 = vmul.f32 %v2062, %v2062
        %v2079 = vmul.f32 %v2063, %v2063
        %v2080 = vmul.f32 %v2064, %v2064
        %v2081 = vmul.f32 %v2065, %v2065
        %v2082 = vmul.f32 %v2066, %v2066
        %v2083 = vmul.f32 %v2067, %v2067
        %v2084 = vmul.f32 %v2068, %v2068
        %v2085 = vmul.f32 %v2069, %v2069
        %v2086 = vmul.f32 %v2070, %v2070
        %v2087 = vmul.f32 %v2071, %v2071
        %v2088 = vmul.f32 %v2072, %v2072
        %v2089 = vmul.f32 %v2073, %v2073
        %v2090 = vmul.f32 %v2074, %v2074
        %v2091 = vmul.f32 %v2075, %v2075
        %v2092 = vmul.f32 %v2076, %v2076
        %v2093 = vadd.f32 %v2077, %v2079
        %v2094 = vadd.f32 %v2093, %v2081
        %v2095 = vadd.f32 %v2094, %v2083
        %v2096 = vadd.f32 %v2095, %v2085
        %v2097 = vadd.f32 %v2096, %v2087
        %v2098 = vadd.f32 %v2097, %v2089
        %v2099 = vadd.f32 %v2098, %v2091
        %v2100 = vrot.slane %v2099, 4
        %v2101 = vadd.f32 %v2099, %v2100
        %v2102 = vrot.slane %v2101, 2
        %v2103 = vadd.f32 %v2101, %v2102
        %v2104 = vrot.slane %v2103, 1
        %v2105 = vadd.f32 %v2103, %v2104
        %v2106 = vadd.f32 %v2078, %v2080
        %v2107 = vadd.f32 %v2106, %v2082
        %v2108 = vadd.f32 %v2107, %v2084
        %v2109 = vadd.f32 %v2108, %v2086
        %v2110 = vadd.f32 %v2109, %v2088
        %v2111 = vadd.f32 %v2110, %v2090
        %v2112 = vadd.f32 %v2111, %v2092
        %v2113 = vrot.slane %v2112, 4
        %v2114 = vadd.f32 %v2112, %v2113
        %v2115 = vrot.slane %v2114, 2
        %v2116 = vadd.f32 %v2114, %v2115
        %v2117 = vrot.slane %v2116, 1
        %v2118 = vadd.f32 %v2116, %v2117
        %v2119 = vmul.f32 %v2105, %v2058
        %v2120 = vmul.f32 %v2118, %v2058
        %v2121 = vadd.f32 %v2119, 1e-06
        %v2122 = vadd.f32 %v2120, 1e-06
        %v2123 = vrsqrt.pop %v2121
        %v2124 = vrsqrt.pop %v2122
        %v2125 = vmul.f32 %v2061, %v2123
        %v2126 = vmul.f32 %v2062, %v2124
        %v2127 = vmul.f32 %v2063, %v2123
        %v2128 = vmul.f32 %v2064, %v2124
        %v2129 = vmul.f32 %v2065, %v2123
        %v2130 = vmul.f32 %v2066, %v2124
        %v2131 = vmul.f32 %v2067, %v2123
        %v2132 = vmul.f32 %v2068, %v2124
        %v2133 = vmul.f32 %v2069, %v2123
        %v2134 = vmul.f32 %v2070, %v2124
        %v2135 = vmul.f32 %v2071, %v2123
        %v2136 = vmul.f32 %v2072, %v2124
        %v2137 = vmul.f32 %v2073, %v2123
        %v2138 = vmul.f32 %v2074, %v2124
        %v2139 = vmul.f32 %v2075, %v2123
        %v2140 = vmul.f32 %v2076, %v2124
        %v2141 = vld [vmem:[%s2] sm:$0xff]
        %v2142 = vld [vmem:[%s2 + $0x8] sm:$0xff]
        %v2143 = vld [vmem:[%s2 + $0x10] sm:$0xff]
        %v2144 = vld [vmem:[%s2 + $0x18] sm:$0xff]
        %v2145 = vld [vmem:[%s2 + $0x20] sm:$0xff]
        %v2146 = vld [vmem:[%s2 + $0x28] sm:$0xff]
        %v2147 = vld [vmem:[%s2 + $0x30] sm:$0xff]
        %v2148 = vld [vmem:[%s2 + $0x38] sm:$0xff]
        %2150 = vset.pattern.permute.xlu0 0
        %2151 = vperm.xlu0 %2150, %v2141
        %v2152 = vpop.permute.xlu0 %2151
        %2155 = vset.pattern.permute.xlu0 0
        %2156 = vperm.xlu0 %2155, %v2142
        %v2157 = vpop.permute.xlu0 %2156
        %2160 = vset.pattern.permute.xlu0 0
        %2161 = vperm.xlu0 %2160, %v2143
        %v2162 = vpop.permute.xlu0 %2161
        %2165 = vset.pattern.permute.xlu0 0
        %2166 = vperm.xlu0 %2165, %v2144
        %v2167 = vpop.permute.xlu0 %2166
        %2170 = vset.pattern.permute.xlu0 0
        %2171 = vperm.xlu0 %2170, %v2145
        %v2172 = vpop.permute.xlu0 %2171
        %2175 = vset.pattern.permute.xlu0 0
        %2176 = vperm.xlu0 %2175, %v2146
        %v2177 = vpop.permute.xlu0 %2176
        %2180 = vset.pattern.permute.xlu0 0
        %2181 = vperm.xlu0 %2180, %v2147
        %v2182 = vpop.permute.xlu0 %2181
        %2185 = vset.pattern.permute.xlu0 0
        %2186 = vperm.xlu0 %2185, %v2148
        %v2187 = vpop.permute.xlu0 %2186
        %v2189 = vmul.f32 %v2125, %v2152
        %v2190 = vmul.f32 %v2126, %v2152
        %v2191 = vmul.f32 %v2127, %v2157
        %v2192 = vmul.f32 %v2128, %v2157
        %v2193 = vmul.f32 %v2129, %v2162
        %v2194 = vmul.f32 %v2130, %v2162
        %v2195 = vmul.f32 %v2131, %v2167
        %v2196 = vmul.f32 %v2132, %v2167
        %v2197 = vmul.f32 %v2133, %v2172
        %v2198 = vmul.f32 %v2134, %v2172
        %v2199 = vmul.f32 %v2135, %v2177
        %v2200 = vmul.f32 %v2136, %v2177
        %v2201 = vmul.f32 %v2137, %v2182
        %v2202 = vmul.f32 %v2138, %v2182
        %v2203 = vmul.f32 %v2139, %v2187
        %v2204 = vmul.f32 %v2140, %v2187
        %v2205 = vld [vmem:[%s3] sm:$0xff]
        %v2206 = vld [vmem:[%s3 + $0x8] sm:$0xff]
        %v2207 = vld [vmem:[%s3 + $0x10] sm:$0xff]
        %v2208 = vld [vmem:[%s3 + $0x18] sm:$0xff]
        %v2209 = vld [vmem:[%s3 + $0x20] sm:$0xff]
        %v2210 = vld [vmem:[%s3 + $0x28] sm:$0xff]
        %v2211 = vld [vmem:[%s3 + $0x30] sm:$0xff]
        %v2212 = vld [vmem:[%s3 + $0x38] sm:$0xff]
        %2214 = vset.pattern.permute.xlu0 0
        %2215 = vperm.xlu0 %2214, %v2205
        %v2216 = vpop.permute.xlu0 %2215
        %2219 = vset.pattern.permute.xlu0 0
        %2220 = vperm.xlu0 %2219, %v2206
        %v2221 = vpop.permute.xlu0 %2220
        %2224 = vset.pattern.permute.xlu0 0
        %2225 = vperm.xlu0 %2224, %v2207
        %v2226 = vpop.permute.xlu0 %2225
        %2229 = vset.pattern.permute.xlu0 0
        %2230 = vperm.xlu0 %2229, %v2208
        %v2231 = vpop.permute.xlu0 %2230
        %2234 = vset.pattern.permute.xlu0 0
        %2235 = vperm.xlu0 %2234, %v2209
        %v2236 = vpop.permute.xlu0 %2235
        %2239 = vset.pattern.permute.xlu0 0
        %2240 = vperm.xlu0 %2239, %v2210
        %v2241 = vpop.permute.xlu0 %2240
        %2244 = vset.pattern.permute.xlu0 0
        %2245 = vperm.xlu0 %2244, %v2211
        %v2246 = vpop.permute.xlu0 %2245
        %2249 = vset.pattern.permute.xlu0 0
        %2250 = vperm.xlu0 %2249, %v2212
        %v2251 = vpop.permute.xlu0 %2250
        %v2253 = vadd.f32 %v2189, %v2216
        %v2254 = vadd.f32 %v2190, %v2216
        %v2255 = vadd.f32 %v2191, %v2221
        %v2256 = vadd.f32 %v2192, %v2221
        %v2257 = vadd.f32 %v2193, %v2226
        %v2258 = vadd.f32 %v2194, %v2226
        %v2259 = vadd.f32 %v2195, %v2231
        %v2260 = vadd.f32 %v2196, %v2231
        %v2261 = vadd.f32 %v2197, %v2236
        %v2262 = vadd.f32 %v2198, %v2236
        %v2263 = vadd.f32 %v2199, %v2241
        %v2264 = vadd.f32 %v2200, %v2241
        %v2265 = vadd.f32 %v2201, %v2246
        %v2266 = vadd.f32 %v2202, %v2246
        %v2267 = vadd.f32 %v2203, %v2251
        %v2268 = vadd.f32 %v2204, %v2251
        %2285 = vrot.lane.b32.xlu0 %v2253, 33
        %v2286 = vpop.permute.xlu0 %2285
        %2287 = vrot.lane.b32.xlu0 %v2254, 33
        %v2288 = vpop.permute.xlu0 %2287
        %2289 = vrot.lane.b32.xlu0 %v2255, 33
        %v2290 = vpop.permute.xlu0 %2289
        %2291 = vrot.lane.b32.xlu0 %v2256, 33
        %v2292 = vpop.permute.xlu0 %2291
        %2293 = vrot.lane.b32.xlu0 %v2257, 33
        %v2294 = vpop.permute.xlu0 %2293
        %2295 = vrot.lane.b32.xlu0 %v2258, 33
        %v2296 = vpop.permute.xlu0 %2295
        %2297 = vrot.lane.b32.xlu0 %v2259, 33
        %v2298 = vpop.permute.xlu0 %2297
        %2299 = vrot.lane.b32.xlu0 %v2260, 33
        %v2300 = vpop.permute.xlu0 %2299
        %2301 = vrot.lane.b32.xlu0 %v2261, 33
        %v2302 = vpop.permute.xlu0 %2301
        %2303 = vrot.lane.b32.xlu0 %v2262, 33
        %v2304 = vpop.permute.xlu0 %2303
        %2305 = vrot.lane.b32.xlu0 %v2263, 33
        %v2306 = vpop.permute.xlu0 %2305
        %2307 = vrot.lane.b32.xlu0 %v2264, 33
        %v2308 = vpop.permute.xlu0 %2307
        %2309 = vrot.lane.b32.xlu0 %v2265, 33
        %v2310 = vpop.permute.xlu0 %2309
        %2311 = vrot.lane.b32.xlu0 %v2266, 33
        %v2312 = vpop.permute.xlu0 %2311
        %2313 = vrot.lane.b32.xlu0 %v2267, 33
        %v2314 = vpop.permute.xlu0 %2313
        %2315 = vrot.lane.b32.xlu0 %v2268, 33
        %v2316 = vpop.permute.xlu0 %2315
        %v2317 = vsel %vm300, %v2286, %v2288
        %v2318 = vsel %vm300, %v2290, %v2292
        %v2319 = vsel %vm300, %v2294, %v2296
        %v2320 = vsel %vm300, %v2298, %v2300
        %v2321 = vsel %vm300, %v2302, %v2304
        %v2322 = vsel %vm300, %v2306, %v2308
        %v2323 = vsel %vm300, %v2310, %v2312
        %v2324 = vsel %vm300, %v2314, %v2316
        %v2349 = vadd.f32 %v644, %v2286
        %v2350 = vadd.f32 %v645, %v2317
        %v2351 = vadd.f32 %v646, %v2288
        %v2352 = vadd.f32 %v647, %v2290
        %v2353 = vadd.f32 %v648, %v2318
        %v2354 = vadd.f32 %v649, %v2292
        %v2355 = vadd.f32 %v650, %v2294
        %v2356 = vadd.f32 %v651, %v2319
        %v2357 = vadd.f32 %v652, %v2296
        %v2358 = vadd.f32 %v653, %v2298
        %v2359 = vadd.f32 %v654, %v2320
        %v2360 = vadd.f32 %v655, %v2300
        %v2361 = vadd.f32 %v656, %v2302
        %v2362 = vadd.f32 %v657, %v2321
        %v2363 = vadd.f32 %v658, %v2304
        %v2364 = vadd.f32 %v659, %v2306
        %v2365 = vadd.f32 %v660, %v2322
        %v2366 = vadd.f32 %v661, %v2308
        %v2367 = vadd.f32 %v662, %v2310
        %v2368 = vadd.f32 %v663, %v2323
        %v2369 = vadd.f32 %v664, %v2312
        %v2370 = vadd.f32 %v665, %v2314
        %v2371 = vadd.f32 %v666, %v2324
        %v2372 = vadd.f32 %v667, %v2316
        %2397 = vrot.lane.b32.xlu0 %v2349, 95
        %v2398 = vpop.permute.xlu0 %2397
        %2399 = vrot.lane.b32.xlu0 %v2350, 95
        %v2400 = vpop.permute.xlu0 %2399
        %2401 = vrot.lane.b32.xlu0 %v2351, 95
        %v2402 = vpop.permute.xlu0 %2401
        %2403 = vrot.lane.b32.xlu0 %v2352, 95
        %v2404 = vpop.permute.xlu0 %2403
        %2405 = vrot.lane.b32.xlu0 %v2353, 95
        %v2406 = vpop.permute.xlu0 %2405
        %2407 = vrot.lane.b32.xlu0 %v2354, 95
        %v2408 = vpop.permute.xlu0 %2407
        %2409 = vrot.lane.b32.xlu0 %v2355, 95
        %v2410 = vpop.permute.xlu0 %2409
        %2411 = vrot.lane.b32.xlu0 %v2356, 95
        %v2412 = vpop.permute.xlu0 %2411
        %2413 = vrot.lane.b32.xlu0 %v2357, 95
        %v2414 = vpop.permute.xlu0 %2413
        %2415 = vrot.lane.b32.xlu0 %v2358, 95
        %v2416 = vpop.permute.xlu0 %2415
        %2417 = vrot.lane.b32.xlu0 %v2359, 95
        %v2418 = vpop.permute.xlu0 %2417
        %2419 = vrot.lane.b32.xlu0 %v2360, 95
        %v2420 = vpop.permute.xlu0 %2419
        %2421 = vrot.lane.b32.xlu0 %v2361, 95
        %v2422 = vpop.permute.xlu0 %2421
        %2423 = vrot.lane.b32.xlu0 %v2362, 95
        %v2424 = vpop.permute.xlu0 %2423
        %2425 = vrot.lane.b32.xlu0 %v2363, 95
        %v2426 = vpop.permute.xlu0 %2425
        %2427 = vrot.lane.b32.xlu0 %v2364, 95
        %v2428 = vpop.permute.xlu0 %2427
        %2429 = vrot.lane.b32.xlu0 %v2365, 95
        %v2430 = vpop.permute.xlu0 %2429
        %2431 = vrot.lane.b32.xlu0 %v2366, 95
        %v2432 = vpop.permute.xlu0 %2431
        %2433 = vrot.lane.b32.xlu0 %v2367, 95
        %v2434 = vpop.permute.xlu0 %2433
        %2435 = vrot.lane.b32.xlu0 %v2368, 95
        %v2436 = vpop.permute.xlu0 %2435
        %2437 = vrot.lane.b32.xlu0 %v2369, 95
        %v2438 = vpop.permute.xlu0 %2437
        %2439 = vrot.lane.b32.xlu0 %v2370, 95
        %v2440 = vpop.permute.xlu0 %2439
        %2441 = vrot.lane.b32.xlu0 %v2371, 95
        %v2442 = vpop.permute.xlu0 %2441
        %2443 = vrot.lane.b32.xlu0 %v2372, 95
        %v2444 = vpop.permute.xlu0 %2443
        %v2445 = vsel %vm1323, %v2398, %v2400
        %v2446 = vsel %vm1323, %v2400, %v2402
        %v2447 = vsel %vm1323, %v2404, %v2406
        %v2448 = vsel %vm1323, %v2406, %v2408
        %v2449 = vsel %vm1323, %v2410, %v2412
        %v2450 = vsel %vm1323, %v2412, %v2414
        %v2451 = vsel %vm1323, %v2416, %v2418
        %v2452 = vsel %vm1323, %v2418, %v2420
        %v2453 = vsel %vm1323, %v2422, %v2424
        %v2454 = vsel %vm1323, %v2424, %v2426
        %v2455 = vsel %vm1323, %v2428, %v2430
        %v2456 = vsel %vm1323, %v2430, %v2432
        %v2457 = vsel %vm1323, %v2434, %v2436
        %v2458 = vsel %vm1323, %v2436, %v2438
        %v2459 = vsel %vm1323, %v2440, %v2442
        %v2460 = vsel %vm1323, %v2442, %v2444
        %2477 = vst [vmem:[%s229] sm:$0xff] %v2445
        %2478 = vst [vmem:[%s229 + $0x8] sm:$0xff] %v2446
        %2479 = vst [vmem:[%s229 + $0x10] sm:$0xff] %v2447
        %2480 = vst [vmem:[%s229 + $0x18] sm:$0xff] %v2448
        %2481 = vst [vmem:[%s229 + $0x20] sm:$0xff] %v2449
        %2482 = vst [vmem:[%s229 + $0x28] sm:$0xff] %v2450
        %2483 = vst [vmem:[%s229 + $0x30] sm:$0xff] %v2451
        %2484 = vst [vmem:[%s229 + $0x38] sm:$0xff] %v2452
        %2485 = vst [vmem:[%s229 + $0x40] sm:$0xff] %v2453
        %2486 = vst [vmem:[%s229 + $0x48] sm:$0xff] %v2454
        %2487 = vst [vmem:[%s229 + $0x50] sm:$0xff] %v2455
        %2488 = vst [vmem:[%s229 + $0x58] sm:$0xff] %v2456
        %2489 = vst [vmem:[%s229 + $0x60] sm:$0xff] %v2457
        %2490 = vst [vmem:[%s229 + $0x68] sm:$0xff] %v2458
        %2491 = vst [vmem:[%s229 + $0x70] sm:$0xff] %v2459
        %2492 = vst [vmem:[%s229 + $0x78] sm:$0xff] %v2460
        %s2493 = sand.u32 %s132, 1
        %s2494 = scalar_lea.sflag [#allocation5], %s2493
        %s2495 = sand.u32 %s132, 1
        %s2496 = smul.addr %s2495, 128
        %s2497 = scalar_lea.vmem [#allocation6], %s2496
        // Predicated region
        $region57: #{tpu_custom_call.1} parent=35 // pred_check
          %p2498 = pneg %p142
        $region58: #{tpu_custom_call.1} parent=35 // pred_check_branch
          %2500 = sbr.rel (%p2498) target = $region60
        $region59: #{tpu_custom_call.1} parent=35 // pred_region
          %s2501 = smul.u32 2, %s26
          %s2503 = ssub.s32 2048, 2048
          %2504 = vsyncadd %s2494, %s2503
          %s2505 = smul.addr %s25, 64
          %s2506 = sadd.s32 %s2501, %s2505
          %s2507 = smul.addr %s2506, 128
          %s2508 = scalar_lea.hbm %s4, %s2507
          %s2509 = sshll.u32 %s2497, 4
          %s2510 = int_to_ptr.vmem [resolvable:$true] %s2509
          %2515 = dma.vmem_to_hbm [thread:$0]  %s2510, 2048, %s2508, %s2494, 256, 1024, 16
        $region60: #{tpu_custom_call.1} parent=35 // pred_fallthru
          _
      $region36: #{tpu_custom_call.1} parent=5 // pred_fallthru
        _
      %p2516 = scmp.le.s32.totalorder 2, %s16
      // Predicated region
      $region61: #{tpu_custom_call.1} parent=5 // pred_check
        %p2517 = pneg %p2516
      $region62: #{tpu_custom_call.1} parent=5 // pred_check_branch
        %2519 = sbr.rel (%p2517) target = $region64
      $region63: #{tpu_custom_call.1} parent=5 // pred_region
        %s2520 = ssub.s32 %s16, 2
        // Predicated region
        $region65: #{tpu_custom_call.1} parent=63 // pred_check
          %p2521 = pneg %p148
        $region66: #{tpu_custom_call.1} parent=63 // pred_check_branch
          %2523 = sbr.rel (%p2521) target = $region68
        $region67: #{tpu_custom_call.1} parent=63 // pred_region
          %s2524 = sand.u32 %s133, 1
          %s2525 = scalar_lea.sflag [#allocation5], %s2524
          %s2526 = sand.u32 %s133, 1
          %s2527 = smul.addr %s2526, 128
          %s2528 = scalar_lea.vmem [#allocation6], %s2527
          %2529 = dma.done %s2525, 2048
        $region68: #{tpu_custom_call.1} parent=63 // pred_fallthru
          _
      $region64: #{tpu_custom_call.1} parent=5 // pred_fallthru
        _
    $region6: #{tpu_custom_call.1} parent=1 // loop_footer
      %s20 = sadd.s32 1, %s16
    $region7: #{tpu_custom_call.1} parent=1 // loop_footer_branch
      %15 = sbr.rel target = $region3
    $region8: #{tpu_custom_call.1} parent=1 // loop_exit
      _
    %2530 = vsyncpa [#allocation4], 1
    %s2531 = scalar_lea.sflag [#allocation4], 1
    %2532 = vsyncpa %s2531, 1
    %2533 = vsyncpa [#allocation5], 1
    %s2534 = scalar_lea.sflag [#allocation5], 1
    %2535 = vsyncpa %s2534, 1

</llo_original>
